<compile_context>
chip_gen: v5e
topology: v5e:2x2
jax: 0.10.0
libtpu: 0.0.40
codegen_flags: <defaults>
</compile_context>

<pallas_src>
import functools

import jax
import jax.numpy as jnp
from jax.experimental import pallas as pl
from jax.experimental.pallas import tpu as pltpu


# ----------------------------------------------------------------------------
# Fused kernel: RGCNConv (basis decomposition, mean aggr) + ResGatedGraphConv
# (sum aggr).  Single grid point; everything lives in VMEM.
# ----------------------------------------------------------------------------
def make_fused_kernel(n_nodes, n_rel, g_dim, h1_dim, h2_dim):
    N, R, H1, H2 = n_nodes, n_rel, h1_dim, h2_dim
    del g_dim  # shapes come from the refs

    def kernel(a_flat_ref, x_ref, w1_ref, b1_ref, a_sum_ref, wg_ref, b2_ref,
               out_ref, y_ref):
        x = x_ref[...]                                                   # (N, g)

        # ---- Stage 1: RGCNConv -------------------------------------------
        # One lane-dense matmul computes every per-relation transform AND the
        # root transform at once: w1 = [W_0 | W_1 | ... | W_{R-1} | W_root].
        z = jnp.dot(x, w1_ref[...],
                    preferred_element_type=jnp.float32)                  # (N, R*H1+H1)

        # Lay the per-relation blocks out as a (R*N, H1) slab so the relation
        # aggregation becomes a single K = R*N matmul (static, unrolled copies).
        for r in range(R):
            y_ref[r * N:(r + 1) * N, :] = z[:, r * H1:(r + 1) * H1]

        root = z[:, R * H1:R * H1 + H1]                                  # (N, H1)
        h = jnp.dot(a_flat_ref[...], y_ref[...],
                    preferred_element_type=jnp.float32)                  # (N, H1)
        h = h + root + b1_ref[...]

        # ---- Stage 2: ResGatedGraphConv ----------------------------------
        # One lane-dense matmul for K|Q|V|skip (wg = [Wk | Wq | Wv | Ws]).
        kqvs = jnp.dot(h, wg_ref[...],
                       preferred_element_type=jnp.float32)               # (N, 4*H2)
        k = kqvs[:, 0 * H2:1 * H2]         # target-node key
        q = kqvs[:, 1 * H2:2 * H2]         # source-node query
        v = kqvs[:, 2 * H2:3 * H2]         # source-node value
        skip = kqvs[:, 3 * H2:4 * H2]      # residual / skip term

        # gate[i, j, :] = sigmoid(k[i] + q[j]); fold the adjacency (edge
        # multiplicity, sum aggregation) into the gate before reducing over j.
        gate = jax.nn.sigmoid(k[:, None, :] + q[None, :, :])             # (N, N, H2)
        weighted = a_sum_ref[...][:, :, None] * gate
        agg = jnp.sum(weighted * v[None, :, :], axis=1)                  # (N, H2)

        out_ref[...] = agg + skip + b2_ref[...]

    return kernel


def fused_forward(a_flat, x, w1, b1, a_sum, wg, b2, *,
                  num_nodes, num_relations, g_dim, h1_dim, h2_dim):
    N, R = num_nodes, num_relations
    kernel = make_fused_kernel(N, R, g_dim, h1_dim, h2_dim)

    flops = int(2 * N * g_dim * (R * h1_dim + h1_dim)     # x @ w1
                + 2 * N * (R * N) * h1_dim                # a_flat @ y
                + 2 * N * h1_dim * 4 * h2_dim             # h @ wg
                + 6 * N * N * h2_dim)                     # gate math
    transcendentals = int(N * N * h2_dim)                 # sigmoid
    nbytes = 4 * int(a_flat.size + x.size + w1.size + b1.size + a_sum.size
                     + wg.size + b2.size + N * h2_dim)

    def vmem_spec():
        return pl.BlockSpec(memory_space=pltpu.MemorySpace.VMEM)

    return pl.pallas_call(
        kernel,
        out_shape=jax.ShapeDtypeStruct((N, h2_dim), jnp.float32),
        in_specs=[vmem_spec() for _ in range(7)],
        out_specs=vmem_spec(),
        scratch_shapes=[pltpu.VMEM((R * N, h1_dim), jnp.float32)],
        compiler_params=pltpu.CompilerParams(vmem_limit_bytes=32 * 1024 * 1024),
        cost_estimate=pl.CostEstimate(flops=flops,
                                      transcendentals=transcendentals,
                                      bytes_accessed=nbytes),
    )(a_flat, x, w1, b1, a_sum, wg, b2)


# ----------------------------------------------------------------------------
# Host-side glue: densify edge lists and pack lane-dense weights.
# ----------------------------------------------------------------------------
def build_graph_operands(edge_index, edge_type, num_nodes, num_relations):
    src, dst = edge_index[0], edge_index[1]
    # counts[i, r, j] = #edges j->i of relation r
    counts = jnp.zeros((num_nodes, num_relations, num_nodes), jnp.float32)
    counts = counts.at[dst, edge_type, src].add(1.0)
    # ResGatedGraphConv (aggr='add'): plain edge multiplicity over all relations
    a_sum = counts.sum(axis=1)                                    # (N, N)
    # RGCNConv (aggr='mean'): row-normalize per (node, relation), then flatten
    # relation-major so A_flat[i, r*N + j] = A_r[i, j].
    deg = counts.sum(axis=-1, keepdims=True)
    a_flat = (counts / jnp.where(deg > 0, deg, 1.0)).reshape(num_nodes, -1)
    return a_flat, a_sum


def pack_weights(params, num_relations):
    # RGCN basis decomposition: W_r = sum_b comp[r, b] * basis[b]   (tiny einsum)
    w_rel = jnp.einsum("rb,bio->rio", params["comp"], params["basis"])  # (R, g, h1)
    R, g_dim, h1_dim = w_rel.shape
    assert R == num_relations
    # [W_0 | ... | W_{R-1} | W_root]  -> (g, R*h1 + h1), lane-dense
    w1 = jnp.concatenate(
        [jnp.transpose(w_rel, (1, 0, 2)).reshape(g_dim, R * h1_dim),
         params["root"]], axis=1)
    # [Wk | Wq | Wv | Ws] -> (h1, 4*h2), lane-dense
    wg = jnp.concatenate(
        [params["wk"], params["wq"], params["wv"], params["ws"]], axis=1)
    return w1, wg


@functools.partial(jax.jit, static_argnames=("num_nodes", "num_relations"))
def res_gate_graph_forward(node_features, edge_index, edge_norm, edge_type,
                           params, *, num_nodes, num_relations):
    del edge_norm  # unused by the PyTorch forward as well
    a_flat, a_sum = build_graph_operands(edge_index, edge_type,
                                         num_nodes, num_relations)
    w1, wg = pack_weights(params, num_relations)
    g_dim = node_features.shape[1]
    h1_dim = params["root"].shape[1]
    h2_dim = params["wk"].shape[1]
    return fused_forward(a_flat, node_features, w1, params["rgcn_bias"],
                         a_sum, wg, params["gate_bias"],
                         num_nodes=num_nodes, num_relations=num_relations,
                         g_dim=g_dim, h1_dim=h1_dim, h2_dim=h2_dim)


# ----------------------------------------------------------------------------
# Pure-JAX reference for the correctness check.
# ----------------------------------------------------------------------------
def reference_forward(node_features, edge_index, edge_type, params,
                      num_nodes, num_relations):
    src, dst = edge_index[0], edge_index[1]
    a_rel = jnp.zeros((num_relations, num_nodes, num_nodes), jnp.float32)
    a_rel = a_rel.at[edge_type, dst, src].add(1.0)
    deg = a_rel.sum(axis=-1, keepdims=True)
    a_rel = a_rel / jnp.where(deg > 0, deg, 1.0)
    a_sum = jnp.zeros((num_nodes, num_nodes), jnp.float32).at[dst, src].add(1.0)

    w_rel = jnp.einsum("rb,bio->rio", params["comp"], params["basis"])
    h1 = (jnp.einsum("rij,jf,rfo->io", a_rel, node_features, w_rel)
          + node_features @ params["root"] + params["rgcn_bias"])
    k = h1 @ params["wk"]
    q = h1 @ params["wq"]
    v = h1 @ params["wv"]
    gate = jax.nn.sigmoid(k[:, None, :] + q[None, :, :])
    agg = jnp.einsum("ij,ijd->id", a_sum, gate * v[None, :, :])
    return agg + h1 @ params["ws"] + params["gate_bias"]


if __name__ == "__main__":
    # Module hyper-parameters (small): args.n_speakers=2, args.batch_size=4
    n_speakers = 2
    num_relations = 2 * n_speakers ** 2          # 8
    num_bases = 4
    g_dim, h1_dim, h2_dim = 16, 32, 32
    num_nodes, num_edges = 16, 48

    key = jax.random.PRNGKey(0)
    ks = jax.random.split(key, 12)

    node_features = jax.random.normal(ks[0], (num_nodes, g_dim), jnp.float32)
    src = jax.random.randint(ks[1], (num_edges,), 0, num_nodes)
    dst = jax.random.randint(ks[2], (num_edges,), 0, num_nodes)
    edge_index = jnp.stack([src, dst], axis=0)
    edge_type = jax.random.randint(ks[3], (num_edges,), 0, num_relations)
    edge_norm = jax.random.uniform(ks[4], (num_edges,), jnp.float32)  # unused

    # Deterministic params (shapes match RGCNConv(num_bases) + ResGatedGraphConv)
    params = {
        "basis": 0.1 * jax.random.normal(ks[5], (num_bases, g_dim, h1_dim), jnp.float32),
        "comp": 0.1 * jax.random.normal(ks[6], (num_relations, num_bases), jnp.float32),
        "root": 0.1 * jax.random.normal(ks[7], (g_dim, h1_dim), jnp.float32),
        "rgcn_bias": jnp.zeros((1, h1_dim), jnp.float32),
        "wk": 0.1 * jax.random.normal(ks[8], (h1_dim, h2_dim), jnp.float32),
        "wq": 0.1 * jax.random.normal(ks[9], (h1_dim, h2_dim), jnp.float32),
        "wv": 0.1 * jax.random.normal(ks[10], (h1_dim, h2_dim), jnp.float32),
        "ws": 0.1 * jax.random.normal(ks[11], (h1_dim, h2_dim), jnp.float32),
        "gate_bias": jnp.zeros((1, h2_dim), jnp.float32),
    }

    out = res_gate_graph_forward(node_features, edge_index, edge_norm, edge_type,
                                 params, num_nodes=num_nodes,
                                 num_relations=num_relations)
    out = jax.block_until_ready(out)

    ref = reference_forward(node_features, edge_index, edge_type, params,
                            num_nodes, num_relations)
    assert out.shape == (num_nodes, h2_dim)
    assert jnp.allclose(out, ref, atol=1e-4, rtol=1e-4)

    print("KERNEL_OK")
</pallas_src>

<mosaic_0001>
module attributes {stable_mosaic.version = 11 : i64} {
  func.func @kernel(%arg0: memref<16x128xf32, #tpu.memory_space<vmem>>, %arg1: memref<16x16xf32, #tpu.memory_space<vmem>>, %arg2: memref<16x288xf32, #tpu.memory_space<vmem>>, %arg3: memref<1x32xf32, #tpu.memory_space<vmem>>, %arg4: memref<16x16xf32, #tpu.memory_space<vmem>>, %arg5: memref<32x128xf32, #tpu.memory_space<vmem>>, %arg6: memref<1x32xf32, #tpu.memory_space<vmem>>, %arg7: memref<16x32xf32, #tpu.memory_space<vmem>>, %arg8: memref<128x32xf32, #tpu.memory_space<vmem>>) attributes {dimension_semantics = [], scalar_prefetch = 0 : i64, scratch_operands = 1 : i64, tpu.core_type = #tpu.core_type<tc>} {
    %c0 = arith.constant 0 : index
    %c0_0 = arith.constant 0 : index
    %0 = vector.load %arg1[%c0, %c0_0] : memref<16x16xf32, #tpu.memory_space<vmem>>, vector<16x16xf32>
    %c0_1 = arith.constant 0 : index
    %c0_2 = arith.constant 0 : index
    %1 = vector.load %arg2[%c0_1, %c0_2] : memref<16x288xf32, #tpu.memory_space<vmem>>, vector<16x288xf32>
    %cst = arith.constant dense<0.000000e+00> : vector<16x288xf32>
    %2 = tpu.matmul %0, %1, %cst {dimension_numbers = #tpu.dot_dimension_numbers<[1], [0], [0], [1], [0, 0, 1, 1], [], []>} : vector<16x16xf32>, vector<16x288xf32>, vector<16x288xf32> -> vector<16x288xf32>
    %3 = vector.extract_strided_slice %2 {offsets = [0, 0], sizes = [16, 32], strides = [1, 1]} : vector<16x288xf32> to vector<16x32xf32>
    %c0_3 = arith.constant 0 : index
    %c0_4 = arith.constant 0 : index
    %4 = vector.load %arg8[%c0_3, %c0_4] : memref<128x32xf32, #tpu.memory_space<vmem>>, vector<16x32xf32>
    tpu.vector_store %arg8[%c0_3, %c0_4], %3 {strides = array<i32>} : memref<128x32xf32, #tpu.memory_space<vmem>>, vector<16x32xf32>,
    %5 = vector.extract_strided_slice %2 {offsets = [0, 32], sizes = [16, 32], strides = [1, 1]} : vector<16x288xf32> to vector<16x32xf32>
    %c16 = arith.constant 16 : index
    %c0_5 = arith.constant 0 : index
    %6 = vector.load %arg8[%c16, %c0_5] : memref<128x32xf32, #tpu.memory_space<vmem>>, vector<16x32xf32>
    tpu.vector_store %arg8[%c16, %c0_5], %5 {strides = array<i32>} : memref<128x32xf32, #tpu.memory_space<vmem>>, vector<16x32xf32>,
    %7 = vector.extract_strided_slice %2 {offsets = [0, 64], sizes = [16, 32], strides = [1, 1]} : vector<16x288xf32> to vector<16x32xf32>
    %c32 = arith.constant 32 : index
    %c0_6 = arith.constant 0 : index
    %8 = vector.load %arg8[%c32, %c0_6] : memref<128x32xf32, #tpu.memory_space<vmem>>, vector<16x32xf32>
    tpu.vector_store %arg8[%c32, %c0_6], %7 {strides = array<i32>} : memref<128x32xf32, #tpu.memory_space<vmem>>, vector<16x32xf32>,
    %9 = vector.extract_strided_slice %2 {offsets = [0, 96], sizes = [16, 32], strides = [1, 1]} : vector<16x288xf32> to vector<16x32xf32>
    %c48 = arith.constant 48 : index
    %c0_7 = arith.constant 0 : index
    %10 = vector.load %arg8[%c48, %c0_7] : memref<128x32xf32, #tpu.memory_space<vmem>>, vector<16x32xf32>
    tpu.vector_store %arg8[%c48, %c0_7], %9 {strides = array<i32>} : memref<128x32xf32, #tpu.memory_space<vmem>>, vector<16x32xf32>,
    %11 = vector.extract_strided_slice %2 {offsets = [0, 128], sizes = [16, 32], strides = [1, 1]} : vector<16x288xf32> to vector<16x32xf32>
    %c64 = arith.constant 64 : index
    %c0_8 = arith.constant 0 : index
    %12 = vector.load %arg8[%c64, %c0_8] : memref<128x32xf32, #tpu.memory_space<vmem>>, vector<16x32xf32>
    tpu.vector_store %arg8[%c64, %c0_8], %11 {strides = array<i32>} : memref<128x32xf32, #tpu.memory_space<vmem>>, vector<16x32xf32>,
    %13 = vector.extract_strided_slice %2 {offsets = [0, 160], sizes = [16, 32], strides = [1, 1]} : vector<16x288xf32> to vector<16x32xf32>
    %c80 = arith.constant 80 : index
    %c0_9 = arith.constant 0 : index
    %14 = vector.load %arg8[%c80, %c0_9] : memref<128x32xf32, #tpu.memory_space<vmem>>, vector<16x32xf32>
    tpu.vector_store %arg8[%c80, %c0_9], %13 {strides = array<i32>} : memref<128x32xf32, #tpu.memory_space<vmem>>, vector<16x32xf32>,
    %15 = vector.extract_strided_slice %2 {offsets = [0, 192], sizes = [16, 32], strides = [1, 1]} : vector<16x288xf32> to vector<16x32xf32>
    %c96 = arith.constant 96 : index
    %c0_10 = arith.constant 0 : index
    %16 = vector.load %arg8[%c96, %c0_10] : memref<128x32xf32, #tpu.memory_space<vmem>>, vector<16x32xf32>
    tpu.vector_store %arg8[%c96, %c0_10], %15 {strides = array<i32>} : memref<128x32xf32, #tpu.memory_space<vmem>>, vector<16x32xf32>,
    %17 = vector.extract_strided_slice %2 {offsets = [0, 224], sizes = [16, 32], strides = [1, 1]} : vector<16x288xf32> to vector<16x32xf32>
    %c112 = arith.constant 112 : index
    %c0_11 = arith.constant 0 : index
    %18 = vector.load %arg8[%c112, %c0_11] : memref<128x32xf32, #tpu.memory_space<vmem>>, vector<16x32xf32>
    tpu.vector_store %arg8[%c112, %c0_11], %17 {strides = array<i32>} : memref<128x32xf32, #tpu.memory_space<vmem>>, vector<16x32xf32>,
    %19 = vector.extract_strided_slice %2 {offsets = [0, 256], sizes = [16, 32], strides = [1, 1]} : vector<16x288xf32> to vector<16x32xf32>
    %c0_12 = arith.constant 0 : index
    %c0_13 = arith.constant 0 : index
    %20 = vector.load %arg0[%c0_12, %c0_13] : memref<16x128xf32, #tpu.memory_space<vmem>>, vector<16x128xf32>
    %c0_14 = arith.constant 0 : index
    %c0_15 = arith.constant 0 : index
    %21 = vector.load %arg8[%c0_14, %c0_15] : memref<128x32xf32, #tpu.memory_space<vmem>>, vector<128x32xf32>
    %cst_16 = arith.constant dense<0.000000e+00> : vector<16x32xf32>
    %22 = tpu.matmul %20, %21, %cst_16 {dimension_numbers = #tpu.dot_dimension_numbers<[1], [0], [0], [1], [0, 0, 1, 1], [], []>} : vector<16x128xf32>, vector<128x32xf32>, vector<16x32xf32> -> vector<16x32xf32>
    %23 = arith.addf %22, %19 : vector<16x32xf32>
    %c0_17 = arith.constant 0 : index
    %c0_18 = arith.constant 0 : index
    %24 = vector.load %arg3[%c0_17, %c0_18] : memref<1x32xf32, #tpu.memory_space<vmem>>, vector<1x32xf32>
    %25 = vector.broadcast %24 : vector<1x32xf32> to vector<16x32xf32>
    %26 = arith.addf %23, %25 : vector<16x32xf32>
    %c0_19 = arith.constant 0 : index
    %c0_20 = arith.constant 0 : index
    %27 = vector.load %arg5[%c0_19, %c0_20] : memref<32x128xf32, #tpu.memory_space<vmem>>, vector<32x128xf32>
    %cst_21 = arith.constant dense<0.000000e+00> : vector<16x128xf32>
    %28 = tpu.matmul %26, %27, %cst_21 {dimension_numbers = #tpu.dot_dimension_numbers<[1], [0], [0], [1], [0, 0, 1, 1], [], []>} : vector<16x32xf32>, vector<32x128xf32>, vector<16x128xf32> -> vector<16x128xf32>
    %29 = vector.extract_strided_slice %28 {offsets = [0, 0], sizes = [16, 32], strides = [1, 1]} : vector<16x128xf32> to vector<16x32xf32>
    %30 = vector.extract_strided_slice %28 {offsets = [0, 32], sizes = [16, 32], strides = [1, 1]} : vector<16x128xf32> to vector<16x32xf32>
    %31 = vector.extract_strided_slice %28 {offsets = [0, 64], sizes = [16, 32], strides = [1, 1]} : vector<16x128xf32> to vector<16x32xf32>
    %32 = vector.extract_strided_slice %28 {offsets = [0, 96], sizes = [16, 32], strides = [1, 1]} : vector<16x128xf32> to vector<16x32xf32>
    %33 = vector.shape_cast %29 : vector<16x32xf32> to vector<16x1x32xf32>
    %34 = vector.shape_cast %30 : vector<16x32xf32> to vector<1x16x32xf32>
    %35 = vector.broadcast %33 : vector<16x1x32xf32> to vector<16x16x32xf32>
    %36 = vector.broadcast %34 : vector<1x16x32xf32> to vector<16x16x32xf32>
    %37 = arith.addf %35, %36 : vector<16x16x32xf32>
    %38 = arith.negf %37 : vector<16x16x32xf32>
    %39 = math.exp %38 : vector<16x16x32xf32>
    %cst_22 = arith.constant 1.000000e+00 : f32
    %40 = vector.broadcast %cst_22 : f32 to vector<16x16x32xf32>
    %41 = arith.addf %40, %39 : vector<16x16x32xf32>
    %42 = arith.divf %40, %41 : vector<16x16x32xf32>
    %c0_23 = arith.constant 0 : index
    %c0_24 = arith.constant 0 : index
    %43 = vector.load %arg4[%c0_23, %c0_24] : memref<16x16xf32, #tpu.memory_space<vmem>>, vector<16x16xf32>
    %44 = vector.shape_cast %43 : vector<16x16xf32> to vector<16x16x1xf32>
    %45 = vector.broadcast %44 : vector<16x16x1xf32> to vector<16x16x32xf32>
    %46 = arith.mulf %45, %42 : vector<16x16x32xf32>
    %47 = vector.shape_cast %31 : vector<16x32xf32> to vector<1x16x32xf32>
    %48 = vector.broadcast %47 : vector<1x16x32xf32> to vector<16x16x32xf32>
    %49 = arith.mulf %46, %48 : vector<16x16x32xf32>
    %cst_25 = arith.constant dense<0.000000e+00> : vector<16x32xf32>
    %50 = vector.multi_reduction <add>, %49, %cst_25 [1] : vector<16x16x32xf32> to vector<16x32xf32>
    %51 = arith.addf %50, %32 : vector<16x32xf32>
    %c0_26 = arith.constant 0 : index
    %c0_27 = arith.constant 0 : index
    %52 = vector.load %arg6[%c0_26, %c0_27] : memref<1x32xf32, #tpu.memory_space<vmem>>, vector<1x32xf32>
    %53 = vector.broadcast %52 : vector<1x32xf32> to vector<16x32xf32>
    %54 = arith.addf %51, %53 : vector<16x32xf32>
    %c0_28 = arith.constant 0 : index
    %c0_29 = arith.constant 0 : index
    %55 = vector.load %arg7[%c0_28, %c0_29] : memref<16x32xf32, #tpu.memory_space<vmem>>, vector<16x32xf32>
    tpu.vector_store %arg7[%c0_28, %c0_29], %54 {strides = array<i32>} : memref<16x32xf32, #tpu.memory_space<vmem>>, vector<16x32xf32>,
    return
  }
}

</mosaic_0001>

<llo_original>
// kernel: res_gate_graph_forward.1
$region0: #{res_gate_graph_forward.1}
  #allocation0 [shape = 'u32[]', space=smem, size = 0x4, offset = 0x4, fixed_abs, tag = 'smem constant byte address 0x4 - core index']
  #allocation1 [shape = 'u32[72,128]{1,0:T(1,128)}', space=vmem, size = 0x9000, scoped, tag = 'internal scratch']
  #allocation2 [shape = 'f32[128,32]{1,0:T(8,128)}', space=vmem, size = 0x10000, scoped, tag = 'scratch operand']
  %s0 = inlined_call_operand.vmem [shape: f32[16,128], index: 0, kind: input, shape index: {}]
  %s1 = inlined_call_operand.vmem [shape: f32[16,16], index: 1, kind: input, shape index: {}]
  %s2 = inlined_call_operand.vmem [shape: f32[16,288], index: 2, kind: input, shape index: {}]
  %s3 = inlined_call_operand.vmem [shape: f32[1,32], index: 3, kind: input, shape index: {}]
  %s4 = inlined_call_operand.vmem [shape: f32[16,16], index: 4, kind: input, shape index: {}]
  %s5 = inlined_call_operand.vmem [shape: f32[32,128], index: 5, kind: input, shape index: {}]
  %s6 = inlined_call_operand.vmem [shape: f32[1,32], index: 6, kind: input, shape index: {}]
  %s7 = inlined_call_operand.hbm [shape: f32[16,32], index: 7, kind: output, shape index: {}]
  %s8 = sld [smem:[#allocation0]]
  $region38: #{res_gate_graph_forward.1} parent=0
    _
  %s10 = ssub.s32 1, %s8
  %s11 = scalar_select 0, %s10, %s8
  $region1: #{res_gate_graph_forward.1} parent=0
    #allocation3 [shape = 'u8[8192]{0}', space=vmem, size = 0x2000, scoped, tag = 'output window, operand 0, single buffered']
    #allocation4 [shape = 's32[1]{0}', space=sflag, size = 0x4, scoped, tag = 'scoped memory for res_gate_graph_forward.1']
    %12 = vsyncpa [#allocation4], 0
    // Predicated region
    $region2: #{res_gate_graph_forward.1} parent=1 // pred_check
      _
    $region3: #{res_gate_graph_forward.1} parent=1 // pred_check_branch
      %14 = sbr.rel (0) target = $region5
    $region4: #{res_gate_graph_forward.1} parent=1 // pred_region
      _
    $region5: #{res_gate_graph_forward.1} parent=1 // pred_fallthru
      _
    // Predicated region
    $region6: #{res_gate_graph_forward.1} parent=1 // pred_check
      _
    $region7: #{res_gate_graph_forward.1} parent=1 // pred_check_branch
      %16 = sbr.rel (0) target = $region9
    $region8: #{res_gate_graph_forward.1} parent=1 // pred_region
      _
    $region9: #{res_gate_graph_forward.1} parent=1 // pred_fallthru
      _
    // Predicated region
    $region10: #{res_gate_graph_forward.1} parent=1 // pred_check
      _
    $region11: #{res_gate_graph_forward.1} parent=1 // pred_check_branch
      %18 = sbr.rel (0) target = $region13
    $region12: #{res_gate_graph_forward.1} parent=1 // pred_region
      _
    $region13: #{res_gate_graph_forward.1} parent=1 // pred_fallthru
      _
    // Predicated region
    $region14: #{res_gate_graph_forward.1} parent=1 // pred_check
      _
    $region15: #{res_gate_graph_forward.1} parent=1 // pred_check_branch
      %20 = sbr.rel (0) target = $region17
    $region16: #{res_gate_graph_forward.1} parent=1 // pred_region
      _
    $region17: #{res_gate_graph_forward.1} parent=1 // pred_fallthru
      _
    // Predicated region
    $region18: #{res_gate_graph_forward.1} parent=1 // pred_check
      _
    $region19: #{res_gate_graph_forward.1} parent=1 // pred_check_branch
      %22 = sbr.rel (0) target = $region21
    $region20: #{res_gate_graph_forward.1} parent=1 // pred_region
      _
    $region21: #{res_gate_graph_forward.1} parent=1 // pred_fallthru
      _
    // Predicated region
    $region22: #{res_gate_graph_forward.1} parent=1 // pred_check
      _
    $region23: #{res_gate_graph_forward.1} parent=1 // pred_check_branch
      %24 = sbr.rel (0) target = $region25
    $region24: #{res_gate_graph_forward.1} parent=1 // pred_region
      _
    $region25: #{res_gate_graph_forward.1} parent=1 // pred_fallthru
      _
    // Predicated region
    $region26: #{res_gate_graph_forward.1} parent=1 // pred_check
      _
    $region27: #{res_gate_graph_forward.1} parent=1 // pred_check_branch
      %26 = sbr.rel (0) target = $region29
    $region28: #{res_gate_graph_forward.1} parent=1 // pred_region
      _
    $region29: #{res_gate_graph_forward.1} parent=1 // pred_fallthru
      _
    %v27 = vld [vmem:[%s1] sm:$0xff]
    %v28 = vld [vmem:[%s1 + $0x8] sm:$0xff]
    %v29 = vld [vmem:[%s2] sm:$0xff]
    %v30 = vld [vmem:[%s2 + $0x8] sm:$0xff]
    %v31 = vld [vmem:[%s2 + $0x10] sm:$0xff]
    %v32 = vld [vmem:[%s2 + $0x18] sm:$0xff]
    %v33 = vld [vmem:[%s2 + $0x20] sm:$0xff]
    %v34 = vld [vmem:[%s2 + $0x28] sm:$0xff]
    %vm35 = vcmask 130048
    %v37 = vsel %vm35, %v27, 0
    %v40 = vsel %vm35, %v28, 0
    %42 = vmatpush.msra.mxu0 0.0
    %43 = vmatpush.msra.mxu0 0.0
    %44 = vmatpush.msra.mxu0 0.0
    %45 = vmatpush.msra.mxu0 0.0
    %46 = vmatpush.msra.mxu0 0.0
    %47 = vmatpush.msra.mxu0 0.0
    %48 = vmatpush.msra.mxu0 0.0
    %49 = vmatpush.msra.mxu0 0.0
    %50 = vmatpush.msra.mxu0 0.0
    %51 = vmatpush.msra.mxu0 0.0
    %52 = vmatpush.msra.mxu0 0.0
    %53 = vmatpush.msra.mxu0 0.0
    %54 = vmatpush.msra.mxu0 0.0
    %55 = vmatpush.msra.mxu0 0.0
    %56 = vmatpush.msra.mxu0 %v32
    %57 = vmatpush.msra.mxu0 %v29
    %58 = vmatmul.f32.gmra.mxu0 %v37
    %v59 = vpop.f32.mrf.mxu0
    %v60 = vadd.f32 0.0, %v59
    %61 = vmatmul.f32.gmra.mxu0 %v40
    %v62 = vpop.f32.mrf.mxu0
    %v63 = vadd.f32 0.0, %v62
    %64 = vdwg.mxu0
    %65 = vmatpush.msra.mxu0 0.0
    %66 = vmatpush.msra.mxu0 0.0
    %67 = vmatpush.msra.mxu0 0.0
    %68 = vmatpush.msra.mxu0 0.0
    %69 = vmatpush.msra.mxu0 0.0
    %70 = vmatpush.msra.mxu0 0.0
    %71 = vmatpush.msra.mxu0 0.0
    %72 = vmatpush.msra.mxu0 0.0
    %73 = vmatpush.msra.mxu0 0.0
    %74 = vmatpush.msra.mxu0 0.0
    %75 = vmatpush.msra.mxu0 0.0
    %76 = vmatpush.msra.mxu0 0.0
    %77 = vmatpush.msra.mxu0 0.0
    %78 = vmatpush.msra.mxu0 0.0
    %79 = vmatpush.msra.mxu0 %v33
    %80 = vmatpush.msra.mxu0 %v30
    %81 = vmatmul.f32.gmra.mxu0 %v37
    %v82 = vpop.f32.mrf.mxu0
    %v83 = vadd.f32 0.0, %v82
    %84 = vmatmul.f32.gmra.mxu0 %v40
    %v85 = vpop.f32.mrf.mxu0
    %v86 = vadd.f32 0.0, %v85
    %87 = vdwg.mxu0
    %88 = vmatpush.msra.mxu0 0.0
    %89 = vmatpush.msra.mxu0 0.0
    %90 = vmatpush.msra.mxu0 0.0
    %91 = vmatpush.msra.mxu0 0.0
    %92 = vmatpush.msra.mxu0 0.0
    %93 = vmatpush.msra.mxu0 0.0
    %94 = vmatpush.msra.mxu0 0.0
    %95 = vmatpush.msra.mxu0 0.0
    %96 = vmatpush.msra.mxu0 0.0
    %97 = vmatpush.msra.mxu0 0.0
    %98 = vmatpush.msra.mxu0 0.0
    %99 = vmatpush.msra.mxu0 0.0
    %100 = vmatpush.msra.mxu0 0.0
    %101 = vmatpush.msra.mxu0 0.0
    %102 = vmatpush.msra.mxu0 %v34
    %103 = vmatpush.msra.mxu0 %v31
    %104 = vmatmul.f32.gmra.mxu0 %v37
    %v105 = vpop.f32.mrf.mxu0
    %v106 = vadd.f32 0.0, %v105
    %107 = vmatmul.f32.gmra.mxu0 %v40
    %v108 = vpop.f32.mrf.mxu0
    %v109 = vadd.f32 0.0, %v108
    %110 = vdwg.mxu0
    %vm111 = vcmask 261120
    %112 = vst.msk [vmem:[#allocation2] sm:$0xff] %vm111, %v60
    %113 = vst.msk [vmem:[#allocation2 + $0x8] sm:$0xff] %vm111, %v63
    %116 = vrot.lane.b32.xlu0 %v60, 96
    %v117 = vpop.permute.xlu0 %116
    %118 = vrot.lane.b32.xlu0 %v63, 96
    %v119 = vpop.permute.xlu0 %118
    %122 = vst.msk [vmem:[#allocation2 + $0x10] sm:$0xff] %vm111, %v117
    %123 = vst.msk [vmem:[#allocation2 + $0x18] sm:$0xff] %vm111, %v119
    %124 = vrot.lane.b32.xlu0 %v60, 64
    %v125 = vpop.permute.xlu0 %124
    %126 = vrot.lane.b32.xlu0 %v63, 64
    %v127 = vpop.permute.xlu0 %126
    %130 = vst.msk [vmem:[#allocation2 + $0x20] sm:$0xff] %vm111, %v125
    %131 = vst.msk [vmem:[#allocation2 + $0x28] sm:$0xff] %vm111, %v127
    %132 = vrot.lane.b32.xlu0 %v60, 32
    %v133 = vpop.permute.xlu0 %132
    %134 = vrot.lane.b32.xlu0 %v63, 32
    %v135 = vpop.permute.xlu0 %134
    %138 = vst.msk [vmem:[#allocation2 + $0x30] sm:$0xff] %vm111, %v133
    %139 = vst.msk [vmem:[#allocation2 + $0x38] sm:$0xff] %vm111, %v135
    %140 = vst.msk [vmem:[#allocation2 + $0x40] sm:$0xff] %vm111, %v83
    %141 = vst.msk [vmem:[#allocation2 + $0x48] sm:$0xff] %vm111, %v86
    %144 = vrot.lane.b32.xlu0 %v83, 96
    %v145 = vpop.permute.xlu0 %144
    %146 = vrot.lane.b32.xlu0 %v86, 96
    %v147 = vpop.permute.xlu0 %146
    %150 = vst.msk [vmem:[#allocation2 + $0x50] sm:$0xff] %vm111, %v145
    %151 = vst.msk [vmem:[#allocation2 + $0x58] sm:$0xff] %vm111, %v147
    %152 = vrot.lane.b32.xlu0 %v83, 64
    %v153 = vpop.permute.xlu0 %152
    %154 = vrot.lane.b32.xlu0 %v86, 64
    %v155 = vpop.permute.xlu0 %154
    %158 = vst.msk [vmem:[#allocation2 + $0x60] sm:$0xff] %vm111, %v153
    %159 = vst.msk [vmem:[#allocation2 + $0x68] sm:$0xff] %vm111, %v155
    %160 = vrot.lane.b32.xlu0 %v83, 32
    %v161 = vpop.permute.xlu0 %160
    %162 = vrot.lane.b32.xlu0 %v86, 32
    %v163 = vpop.permute.xlu0 %162
    %166 = vst.msk [vmem:[#allocation2 + $0x70] sm:$0xff] %vm111, %v161
    %167 = vst.msk [vmem:[#allocation2 + $0x78] sm:$0xff] %vm111, %v163
    %v168 = vld [vmem:[%s0] sm:$0xff]
    %v169 = vld [vmem:[%s0 + $0x8] sm:$0xff]
    %v170 = vld [vmem:[#allocation2] sm:$0xff]
    %v171 = vld [vmem:[#allocation2 + $0x8] sm:$0xff]
    %v172 = vld [vmem:[#allocation2 + $0x10] sm:$0xff]
    %v173 = vld [vmem:[#allocation2 + $0x18] sm:$0xff]
    %v174 = vld [vmem:[#allocation2 + $0x20] sm:$0xff]
    %v175 = vld [vmem:[#allocation2 + $0x28] sm:$0xff]
    %v176 = vld [vmem:[#allocation2 + $0x30] sm:$0xff]
    %v177 = vld [vmem:[#allocation2 + $0x38] sm:$0xff]
    %v178 = vld [vmem:[#allocation2 + $0x40] sm:$0xff]
    %v179 = vld [vmem:[#allocation2 + $0x48] sm:$0xff]
    %v180 = vld [vmem:[#allocation2 + $0x50] sm:$0xff]
    %v181 = vld [vmem:[#allocation2 + $0x58] sm:$0xff]
    %v182 = vld [vmem:[#allocation2 + $0x60] sm:$0xff]
    %v183 = vld [vmem:[#allocation2 + $0x68] sm:$0xff]
    %v184 = vld [vmem:[#allocation2 + $0x70] sm:$0xff]
    %v185 = vld [vmem:[#allocation2 + $0x78] sm:$0xff]
    %186 = vmatpush.msra.mxu0 %v185
    %187 = vmatpush.msra.mxu0 %v184
    %188 = vmatpush.msra.mxu0 %v183
    %189 = vmatpush.msra.mxu0 %v182
    %190 = vmatpush.msra.mxu0 %v181
    %191 = vmatpush.msra.mxu0 %v180
    %192 = vmatpush.msra.mxu0 %v179
    %193 = vmatpush.msra.mxu0 %v178
    %194 = vmatpush.msra.mxu0 %v177
    %195 = vmatpush.msra.mxu0 %v176
    %196 = vmatpush.msra.mxu0 %v175
    %197 = vmatpush.msra.mxu0 %v174
    %198 = vmatpush.msra.mxu0 %v173
    %199 = vmatpush.msra.mxu0 %v172
    %200 = vmatpush.msra.mxu0 %v171
    %201 = vmatpush.msra.mxu0 %v170
    %202 = vmatmul.f32.gmra.mxu0 %v168
    %v203 = vpop.f32.mrf.mxu0
    %v204 = vadd.f32 %v106, %v203
    %205 = vmatmul.f32.gmra.mxu0 %v169
    %v206 = vpop.f32.mrf.mxu0
    %v207 = vadd.f32 %v109, %v206
    %208 = vdwg.mxu0
    %v209 = vld [vmem:[%s3] sm:$0x1]
    %v211 = vperm.slane %v209, 0
    %v213 = vadd.f32 %v204, %v211
    %v214 = vadd.f32 %v207, %v211
    %v215 = vld [vmem:[%s5] sm:$0xff]
    %v216 = vld [vmem:[%s5 + $0x8] sm:$0xff]
    %v217 = vld [vmem:[%s5 + $0x10] sm:$0xff]
    %v218 = vld [vmem:[%s5 + $0x18] sm:$0xff]
    %v220 = vsel %vm111, %v213, 0
    %v223 = vsel %vm111, %v214, 0
    %225 = vmatpush.msra.mxu0 0.0
    %226 = vmatpush.msra.mxu0 0.0
    %227 = vmatpush.msra.mxu0 0.0
    %228 = vmatpush.msra.mxu0 0.0
    %229 = vmatpush.msra.mxu0 0.0
    %230 = vmatpush.msra.mxu0 0.0
    %231 = vmatpush.msra.mxu0 0.0
    %232 = vmatpush.msra.mxu0 0.0
    %233 = vmatpush.msra.mxu0 0.0
    %234 = vmatpush.msra.mxu0 0.0
    %235 = vmatpush.msra.mxu0 0.0
    %236 = vmatpush.msra.mxu0 0.0
    %237 = vmatpush.msra.mxu0 %v218
    %238 = vmatpush.msra.mxu0 %v217
    %239 = vmatpush.msra.mxu0 %v216
    %240 = vmatpush.msra.mxu0 %v215
    %241 = vmatmul.f32.gmra.mxu0 %v220
    %v242 = vpop.f32.mrf.mxu0
    %v243 = vadd.f32 0.0, %v242
    %244 = vmatmul.f32.gmra.mxu0 %v223
    %v245 = vpop.f32.mrf.mxu0
    %v246 = vadd.f32 0.0, %v245
    %247 = vdwg.mxu0
    %v250 = vrot.slane %v243, 1
    %v251 = vrot.slane %v243, 2
    %v252 = vrot.slane %v243, 3
    %v253 = vrot.slane %v243, 4
    %v254 = vrot.slane %v243, 5
    %v255 = vrot.slane %v243, 6
    %v256 = vrot.slane %v243, 7
    %v257 = vrot.slane %v246, 1
    %v258 = vrot.slane %v246, 2
    %v259 = vrot.slane %v246, 3
    %v260 = vrot.slane %v246, 4
    %v261 = vrot.slane %v246, 5
    %v262 = vrot.slane %v246, 6
    %v263 = vrot.slane %v246, 7
    %v264 = vperm.slane %v243, 0
    %v265 = vperm.slane %v250, 0
    %v266 = vperm.slane %v251, 0
    %v267 = vperm.slane %v252, 0
    %v268 = vperm.slane %v253, 0
    %v269 = vperm.slane %v254, 0
    %v270 = vperm.slane %v255, 0
    %v271 = vperm.slane %v256, 0
    %v272 = vperm.slane %v246, 0
    %v273 = vperm.slane %v257, 0
    %v274 = vperm.slane %v258, 0
    %v275 = vperm.slane %v259, 0
    %v276 = vperm.slane %v260, 0
    %v277 = vperm.slane %v261, 0
    %v278 = vperm.slane %v262, 0
    %v279 = vperm.slane %v263, 0
    %296 = vrot.lane.b32.xlu0 %v243, 96
    %v297 = vpop.permute.xlu0 %296
    %298 = vrot.lane.b32.xlu0 %v246, 96
    %v299 = vpop.permute.xlu0 %298
    %v302 = vadd.f32 %v264, %v297
    %v303 = vadd.f32 %v264, %v299
    %v304 = vadd.f32 %v265, %v297
    %v305 = vadd.f32 %v265, %v299
    %v306 = vadd.f32 %v266, %v297
    %v307 = vadd.f32 %v266, %v299
    %v308 = vadd.f32 %v267, %v297
    %v309 = vadd.f32 %v267, %v299
    %v310 = vadd.f32 %v268, %v297
    %v311 = vadd.f32 %v268, %v299
    %v312 = vadd.f32 %v269, %v297
    %v313 = vadd.f32 %v269, %v299
    %v314 = vadd.f32 %v270, %v297
    %v315 = vadd.f32 %v270, %v299
    %v316 = vadd.f32 %v271, %v297
    %v317 = vadd.f32 %v271, %v299
    %v318 = vadd.f32 %v272, %v297
    %v319 = vadd.f32 %v272, %v299
    %v320 = vadd.f32 %v273, %v297
    %v321 = vadd.f32 %v273, %v299
    %v322 = vadd.f32 %v274, %v297
    %v323 = vadd.f32 %v274, %v299
    %v324 = vadd.f32 %v275, %v297
    %v325 = vadd.f32 %v275, %v299
    %v326 = vadd.f32 %v276, %v297
    %v327 = vadd.f32 %v276, %v299
    %v328 = vadd.f32 %v277, %v297
    %v329 = vadd.f32 %v277, %v299
    %v330 = vadd.f32 %v278, %v297
    %v331 = vadd.f32 %v278, %v299
    %v332 = vadd.f32 %v279, %v297
    %v333 = vadd.f32 %v279, %v299
    %v334 = vxor.u32 %v302, 2147483648
    %v335 = vxor.u32 %v303, 2147483648
    %v336 = vxor.u32 %v304, 2147483648
    %v337 = vxor.u32 %v305, 2147483648
    %v338 = vxor.u32 %v306, 2147483648
    %v339 = vxor.u32 %v307, 2147483648
    %v340 = vxor.u32 %v308, 2147483648
    %v341 = vxor.u32 %v309, 2147483648
    %v342 = vxor.u32 %v310, 2147483648
    %v343 = vxor.u32 %v311, 2147483648
    %v344 = vxor.u32 %v312, 2147483648
    %v345 = vxor.u32 %v313, 2147483648
    %v346 = vxor.u32 %v314, 2147483648
    %v347 = vxor.u32 %v315, 2147483648
    %v348 = vxor.u32 %v316, 2147483648
    %v349 = vxor.u32 %v317, 2147483648
    %v350 = vxor.u32 %v318, 2147483648
    %v351 = vxor.u32 %v319, 2147483648
    %v352 = vxor.u32 %v320, 2147483648
    %v353 = vxor.u32 %v321, 2147483648
    %v354 = vxor.u32 %v322, 2147483648
    %v355 = vxor.u32 %v323, 2147483648
    %v356 = vxor.u32 %v324, 2147483648
    %v357 = vxor.u32 %v325, 2147483648
    %v358 = vxor.u32 %v326, 2147483648
    %v359 = vxor.u32 %v327, 2147483648
    %v360 = vxor.u32 %v328, 2147483648
    %v361 = vxor.u32 %v329, 2147483648
    %v362 = vxor.u32 %v330, 2147483648
    %v363 = vxor.u32 %v331, 2147483648
    %v364 = vxor.u32 %v332, 2147483648
    %v365 = vxor.u32 %v333, 2147483648
    %v366 = vmul.f32 %v334, 1.442695
    %v367 = vpow.pop %v366
    %v368 = vmul.f32 %v335, 1.442695
    %v369 = vpow.pop %v368
    %v370 = vmul.f32 %v336, 1.442695
    %v371 = vpow.pop %v370
    %v372 = vmul.f32 %v337, 1.442695
    %v373 = vpow.pop %v372
    %v374 = vmul.f32 %v338, 1.442695
    %v375 = vpow.pop %v374
    %v376 = vmul.f32 %v339, 1.442695
    %v377 = vpow.pop %v376
    %v378 = vmul.f32 %v340, 1.442695
    %v379 = vpow.pop %v378
    %v380 = vmul.f32 %v341, 1.442695
    %v381 = vpow.pop %v380
    %v382 = vmul.f32 %v342, 1.442695
    %v383 = vpow.pop %v382
    %v384 = vmul.f32 %v343, 1.442695
    %v385 = vpow.pop %v384
    %v386 = vmul.f32 %v344, 1.442695
    %v387 = vpow.pop %v386
    %v388 = vmul.f32 %v345, 1.442695
    %v389 = vpow.pop %v388
    %v390 = vmul.f32 %v346, 1.442695
    %v391 = vpow.pop %v390
    %v392 = vmul.f32 %v347, 1.442695
    %v393 = vpow.pop %v392
    %v394 = vmul.f32 %v348, 1.442695
    %v395 = vpow.pop %v394
    %v396 = vmul.f32 %v349, 1.442695
    %v397 = vpow.pop %v396
    %v398 = vmul.f32 %v350, 1.442695
    %v399 = vpow.pop %v398
    %v400 = vmul.f32 %v351, 1.442695
    %v401 = vpow.pop %v400
    %v402 = vmul.f32 %v352, 1.442695
    %v403 = vpow.pop %v402
    %v404 = vmul.f32 %v353, 1.442695
    %v405 = vpow.pop %v404
    %v406 = vmul.f32 %v354, 1.442695
    %v407 = vpow.pop %v406
    %v408 = vmul.f32 %v355, 1.442695
    %v409 = vpow.pop %v408
    %v410 = vmul.f32 %v356, 1.442695
    %v411 = vpow.pop %v410
    %v412 = vmul.f32 %v357, 1.442695
    %v413 = vpow.pop %v412
    %v414 = vmul.f32 %v358, 1.442695
    %v415 = vpow.pop %v414
    %v416 = vmul.f32 %v359, 1.442695
    %v417 = vpow.pop %v416
    %v418 = vmul.f32 %v360, 1.442695
    %v419 = vpow.pop %v418
    %v420 = vmul.f32 %v361, 1.442695
    %v421 = vpow.pop %v420
    %v422 = vmul.f32 %v362, 1.442695
    %v423 = vpow.pop %v422
    %v424 = vmul.f32 %v363, 1.442695
    %v425 = vpow.pop %v424
    %v426 = vmul.f32 %v364, 1.442695
    %v427 = vpow.pop %v426
    %v428 = vmul.f32 %v365, 1.442695
    %v429 = vpow.pop %v428
    %v430 = vadd.f32 %v367, 1.0
    %v431 = vadd.f32 %v369, 1.0
    %v432 = vadd.f32 %v371, 1.0
    %v433 = vadd.f32 %v373, 1.0
    %v434 = vadd.f32 %v375, 1.0
    %v435 = vadd.f32 %v377, 1.0
    %v436 = vadd.f32 %v379, 1.0
    %v437 = vadd.f32 %v381, 1.0
    %v438 = vadd.f32 %v383, 1.0
    %v439 = vadd.f32 %v385, 1.0
    %v440 = vadd.f32 %v387, 1.0
    %v441 = vadd.f32 %v389, 1.0
    %v442 = vadd.f32 %v391, 1.0
    %v443 = vadd.f32 %v393, 1.0
    %v444 = vadd.f32 %v395, 1.0
    %v445 = vadd.f32 %v397, 1.0
    %v446 = vadd.f32 %v399, 1.0
    %v447 = vadd.f32 %v401, 1.0
    %v448 = vadd.f32 %v403, 1.0
    %v449 = vadd.f32 %v405, 1.0
    %v450 = vadd.f32 %v407, 1.0
    %v451 = vadd.f32 %v409, 1.0
    %v452 = vadd.f32 %v411, 1.0
    %v453 = vadd.f32 %v413, 1.0
    %v454 = vadd.f32 %v415, 1.0
    %v455 = vadd.f32 %v417, 1.0
    %v456 = vadd.f32 %v419, 1.0
    %v457 = vadd.f32 %v421, 1.0
    %v458 = vadd.f32 %v423, 1.0
    %v459 = vadd.f32 %v425, 1.0
    %v460 = vadd.f32 %v427, 1.0
    %v461 = vadd.f32 %v429, 1.0
    %v462 = vrcp.pop %v430
    %v463 = vmul.f32 %v430, %v462
    %v464 = vsub.f32 1.0, %v463
    %v465 = vmul.f32 %v462, %v464
    %v466 = vadd.f32 %v462, %v465
    %vm467 = vweird.f32 %v430
    %vm468 = vweird.f32 %v462
    %vm469 = vmor %vm467, %vm468
    %v470 = vsel %vm469, %v462, %v466
    %v471 = vand.u32 2147483647, %v430
    %vm472 = vcmp.eq.f32.partialorder %v471, 8.507059e+37
    %v473 = vand.u32 %v430, 2147483648
    %v474 = vor.u32 1.1754944e-38, %v473
    %v475 = vsel %vm472, %v474, %v470
    %v476 = vmul.f32 1.0, %v475
    %v477 = vrcp.pop %v431
    %v478 = vmul.f32 %v431, %v477
    %v479 = vsub.f32 1.0, %v478
    %v480 = vmul.f32 %v477, %v479
    %v481 = vadd.f32 %v477, %v480
    %vm482 = vweird.f32 %v431
    %vm483 = vweird.f32 %v477
    %vm484 = vmor %vm482, %vm483
    %v485 = vsel %vm484, %v477, %v481
    %v486 = vand.u32 2147483647, %v431
    %vm487 = vcmp.eq.f32.partialorder %v486, 8.507059e+37
    %v488 = vand.u32 %v431, 2147483648
    %v489 = vor.u32 1.1754944e-38, %v488
    %v490 = vsel %vm487, %v489, %v485
    %v491 = vmul.f32 1.0, %v490
    %v492 = vrcp.pop %v432
    %v493 = vmul.f32 %v432, %v492
    %v494 = vsub.f32 1.0, %v493
    %v495 = vmul.f32 %v492, %v494
    %v496 = vadd.f32 %v492, %v495
    %vm497 = vweird.f32 %v432
    %vm498 = vweird.f32 %v492
    %vm499 = vmor %vm497, %vm498
    %v500 = vsel %vm499, %v492, %v496
    %v501 = vand.u32 2147483647, %v432
    %vm502 = vcmp.eq.f32.partialorder %v501, 8.507059e+37
    %v503 = vand.u32 %v432, 2147483648
    %v504 = vor.u32 1.1754944e-38, %v503
    %v505 = vsel %vm502, %v504, %v500
    %v506 = vmul.f32 1.0, %v505
    %v507 = vrcp.pop %v433
    %v508 = vmul.f32 %v433, %v507
    %v509 = vsub.f32 1.0, %v508
    %v510 = vmul.f32 %v507, %v509
    %v511 = vadd.f32 %v507, %v510
    %vm512 = vweird.f32 %v433
    %vm513 = vweird.f32 %v507
    %vm514 = vmor %vm512, %vm513
    %v515 = vsel %vm514, %v507, %v511
    %v516 = vand.u32 2147483647, %v433
    %vm517 = vcmp.eq.f32.partialorder %v516, 8.507059e+37
    %v518 = vand.u32 %v433, 2147483648
    %v519 = vor.u32 1.1754944e-38, %v518
    %v520 = vsel %vm517, %v519, %v515
    %v521 = vmul.f32 1.0, %v520
    %v522 = vrcp.pop %v434
    %v523 = vmul.f32 %v434, %v522
    %v524 = vsub.f32 1.0, %v523
    %v525 = vmul.f32 %v522, %v524
    %v526 = vadd.f32 %v522, %v525
    %vm527 = vweird.f32 %v434
    %vm528 = vweird.f32 %v522
    %vm529 = vmor %vm527, %vm528
    %v530 = vsel %vm529, %v522, %v526
    %v531 = vand.u32 2147483647, %v434
    %vm532 = vcmp.eq.f32.partialorder %v531, 8.507059e+37
    %v533 = vand.u32 %v434, 2147483648
    %v534 = vor.u32 1.1754944e-38, %v533
    %v535 = vsel %vm532, %v534, %v530
    %v536 = vmul.f32 1.0, %v535
    %v537 = vrcp.pop %v435
    %v538 = vmul.f32 %v435, %v537
    %v539 = vsub.f32 1.0, %v538
    %v540 = vmul.f32 %v537, %v539
    %v541 = vadd.f32 %v537, %v540
    %vm542 = vweird.f32 %v435
    %vm543 = vweird.f32 %v537
    %vm544 = vmor %vm542, %vm543
    %v545 = vsel %vm544, %v537, %v541
    %v546 = vand.u32 2147483647, %v435
    %vm547 = vcmp.eq.f32.partialorder %v546, 8.507059e+37
    %v548 = vand.u32 %v435, 2147483648
    %v549 = vor.u32 1.1754944e-38, %v548
    %v550 = vsel %vm547, %v549, %v545
    %v551 = vmul.f32 1.0, %v550
    %v552 = vrcp.pop %v436
    %v553 = vmul.f32 %v436, %v552
    %v554 = vsub.f32 1.0, %v553
    %v555 = vmul.f32 %v552, %v554
    %v556 = vadd.f32 %v552, %v555
    %vm557 = vweird.f32 %v436
    %vm558 = vweird.f32 %v552
    %vm559 = vmor %vm557, %vm558
    %v560 = vsel %vm559, %v552, %v556
    %v561 = vand.u32 2147483647, %v436
    %vm562 = vcmp.eq.f32.partialorder %v561, 8.507059e+37
    %v563 = vand.u32 %v436, 2147483648
    %v564 = vor.u32 1.1754944e-38, %v563
    %v565 = vsel %vm562, %v564, %v560
    %v566 = vmul.f32 1.0, %v565
    %v567 = vrcp.pop %v437
    %v568 = vmul.f32 %v437, %v567
    %v569 = vsub.f32 1.0, %v568
    %v570 = vmul.f32 %v567, %v569
    %v571 = vadd.f32 %v567, %v570
    %vm572 = vweird.f32 %v437
    %vm573 = vweird.f32 %v567
    %vm574 = vmor %vm572, %vm573
    %v575 = vsel %vm574, %v567, %v571
    %v576 = vand.u32 2147483647, %v437
    %vm577 = vcmp.eq.f32.partialorder %v576, 8.507059e+37
    %v578 = vand.u32 %v437, 2147483648
    %v579 = vor.u32 1.1754944e-38, %v578
    %v580 = vsel %vm577, %v579, %v575
    %v581 = vmul.f32 1.0, %v580
    %v582 = vrcp.pop %v438
    %v583 = vmul.f32 %v438, %v582
    %v584 = vsub.f32 1.0, %v583
    %v585 = vmul.f32 %v582, %v584
    %v586 = vadd.f32 %v582, %v585
    %vm587 = vweird.f32 %v438
    %vm588 = vweird.f32 %v582
    %vm589 = vmor %vm587, %vm588
    %v590 = vsel %vm589, %v582, %v586
    %v591 = vand.u32 2147483647, %v438
    %vm592 = vcmp.eq.f32.partialorder %v591, 8.507059e+37
    %v593 = vand.u32 %v438, 2147483648
    %v594 = vor.u32 1.1754944e-38, %v593
    %v595 = vsel %vm592, %v594, %v590
    %v596 = vmul.f32 1.0, %v595
    %v597 = vrcp.pop %v439
    %v598 = vmul.f32 %v439, %v597
    %v599 = vsub.f32 1.0, %v598
    %v600 = vmul.f32 %v597, %v599
    %v601 = vadd.f32 %v597, %v600
    %vm602 = vweird.f32 %v439
    %vm603 = vweird.f32 %v597
    %vm604 = vmor %vm602, %vm603
    %v605 = vsel %vm604, %v597, %v601
    %v606 = vand.u32 2147483647, %v439
    %vm607 = vcmp.eq.f32.partialorder %v606, 8.507059e+37
    %v608 = vand.u32 %v439, 2147483648
    %v609 = vor.u32 1.1754944e-38, %v608
    %v610 = vsel %vm607, %v609, %v605
    %v611 = vmul.f32 1.0, %v610
    %v612 = vrcp.pop %v440
    %v613 = vmul.f32 %v440, %v612
    %v614 = vsub.f32 1.0, %v613
    %v615 = vmul.f32 %v612, %v614
    %v616 = vadd.f32 %v612, %v615
    %vm617 = vweird.f32 %v440
    %vm618 = vweird.f32 %v612
    %vm619 = vmor %vm617, %vm618
    %v620 = vsel %vm619, %v612, %v616
    %v621 = vand.u32 2147483647, %v440
    %vm622 = vcmp.eq.f32.partialorder %v621, 8.507059e+37
    %v623 = vand.u32 %v440, 2147483648
    %v624 = vor.u32 1.1754944e-38, %v623
    %v625 = vsel %vm622, %v624, %v620
    %v626 = vmul.f32 1.0, %v625
    %v627 = vrcp.pop %v441
    %v628 = vmul.f32 %v441, %v627
    %v629 = vsub.f32 1.0, %v628
    %v630 = vmul.f32 %v627, %v629
    %v631 = vadd.f32 %v627, %v630
    %vm632 = vweird.f32 %v441
    %vm633 = vweird.f32 %v627
    %vm634 = vmor %vm632, %vm633
    %v635 = vsel %vm634, %v627, %v631
    %v636 = vand.u32 2147483647, %v441
    %vm637 = vcmp.eq.f32.partialorder %v636, 8.507059e+37
    %v638 = vand.u32 %v441, 2147483648
    %v639 = vor.u32 1.1754944e-38, %v638
    %v640 = vsel %vm637, %v639, %v635
    %v641 = vmul.f32 1.0, %v640
    %v642 = vrcp.pop %v442
    %v643 = vmul.f32 %v442, %v642
    %v644 = vsub.f32 1.0, %v643
    %v645 = vmul.f32 %v642, %v644
    %v646 = vadd.f32 %v642, %v645
    %vm647 = vweird.f32 %v442
    %vm648 = vweird.f32 %v642
    %vm649 = vmor %vm647, %vm648
    %v650 = vsel %vm649, %v642, %v646
    %v651 = vand.u32 2147483647, %v442
    %vm652 = vcmp.eq.f32.partialorder %v651, 8.507059e+37
    %v653 = vand.u32 %v442, 2147483648
    %v654 = vor.u32 1.1754944e-38, %v653
    %v655 = vsel %vm652, %v654, %v650
    %v656 = vmul.f32 1.0, %v655
    %v657 = vrcp.pop %v443
    %v658 = vmul.f32 %v443, %v657
    %v659 = vsub.f32 1.0, %v658
    %v660 = vmul.f32 %v657, %v659
    %v661 = vadd.f32 %v657, %v660
    %vm662 = vweird.f32 %v443
    %vm663 = vweird.f32 %v657
    %vm664 = vmor %vm662, %vm663
    %v665 = vsel %vm664, %v657, %v661
    %v666 = vand.u32 2147483647, %v443
    %vm667 = vcmp.eq.f32.partialorder %v666, 8.507059e+37
    %v668 = vand.u32 %v443, 2147483648
    %v669 = vor.u32 1.1754944e-38, %v668
    %v670 = vsel %vm667, %v669, %v665
    %v671 = vmul.f32 1.0, %v670
    %v672 = vrcp.pop %v444
    %v673 = vmul.f32 %v444, %v672
    %v674 = vsub.f32 1.0, %v673
    %v675 = vmul.f32 %v672, %v674
    %v676 = vadd.f32 %v672, %v675
    %vm677 = vweird.f32 %v444
    %vm678 = vweird.f32 %v672
    %vm679 = vmor %vm677, %vm678
    %v680 = vsel %vm679, %v672, %v676
    %v681 = vand.u32 2147483647, %v444
    %vm682 = vcmp.eq.f32.partialorder %v681, 8.507059e+37
    %v683 = vand.u32 %v444, 2147483648
    %v684 = vor.u32 1.1754944e-38, %v683
    %v685 = vsel %vm682, %v684, %v680
    %v686 = vmul.f32 1.0, %v685
    %v687 = vrcp.pop %v445
    %v688 = vmul.f32 %v445, %v687
    %v689 = vsub.f32 1.0, %v688
    %v690 = vmul.f32 %v687, %v689
    %v691 = vadd.f32 %v687, %v690
    %vm692 = vweird.f32 %v445
    %vm693 = vweird.f32 %v687
    %vm694 = vmor %vm692, %vm693
    %v695 = vsel %vm694, %v687, %v691
    %v696 = vand.u32 2147483647, %v445
    %vm697 = vcmp.eq.f32.partialorder %v696, 8.507059e+37
    %v698 = vand.u32 %v445, 2147483648
    %v699 = vor.u32 1.1754944e-38, %v698
    %v700 = vsel %vm697, %v699, %v695
    %v701 = vmul.f32 1.0, %v700
    %v702 = vrcp.pop %v446
    %v703 = vmul.f32 %v446, %v702
    %v704 = vsub.f32 1.0, %v703
    %v705 = vmul.f32 %v702, %v704
    %v706 = vadd.f32 %v702, %v705
    %vm707 = vweird.f32 %v446
    %vm708 = vweird.f32 %v702
    %vm709 = vmor %vm707, %vm708
    %v710 = vsel %vm709, %v702, %v706
    %v711 = vand.u32 2147483647, %v446
    %vm712 = vcmp.eq.f32.partialorder %v711, 8.507059e+37
    %v713 = vand.u32 %v446, 2147483648
    %v714 = vor.u32 1.1754944e-38, %v713
    %v715 = vsel %vm712, %v714, %v710
    %v716 = vmul.f32 1.0, %v715
    %v717 = vrcp.pop %v447
    %v718 = vmul.f32 %v447, %v717
    %v719 = vsub.f32 1.0, %v718
    %v720 = vmul.f32 %v717, %v719
    %v721 = vadd.f32 %v717, %v720
    %vm722 = vweird.f32 %v447
    %vm723 = vweird.f32 %v717
    %vm724 = vmor %vm722, %vm723
    %v725 = vsel %vm724, %v717, %v721
    %v726 = vand.u32 2147483647, %v447
    %vm727 = vcmp.eq.f32.partialorder %v726, 8.507059e+37
    %v728 = vand.u32 %v447, 2147483648
    %v729 = vor.u32 1.1754944e-38, %v728
    %v730 = vsel %vm727, %v729, %v725
    %v731 = vmul.f32 1.0, %v730
    %v732 = vrcp.pop %v448
    %v733 = vmul.f32 %v448, %v732
    %v734 = vsub.f32 1.0, %v733
    %v735 = vmul.f32 %v732, %v734
    %v736 = vadd.f32 %v732, %v735
    %vm737 = vweird.f32 %v448
    %vm738 = vweird.f32 %v732
    %vm739 = vmor %vm737, %vm738
    %v740 = vsel %vm739, %v732, %v736
    %v741 = vand.u32 2147483647, %v448
    %vm742 = vcmp.eq.f32.partialorder %v741, 8.507059e+37
    %v743 = vand.u32 %v448, 2147483648
    %v744 = vor.u32 1.1754944e-38, %v743
    %v745 = vsel %vm742, %v744, %v740
    %v746 = vmul.f32 1.0, %v745
    %v747 = vrcp.pop %v449
    %v748 = vmul.f32 %v449, %v747
    %v749 = vsub.f32 1.0, %v748
    %v750 = vmul.f32 %v747, %v749
    %v751 = vadd.f32 %v747, %v750
    %vm752 = vweird.f32 %v449
    %vm753 = vweird.f32 %v747
    %vm754 = vmor %vm752, %vm753
    %v755 = vsel %vm754, %v747, %v751
    %v756 = vand.u32 2147483647, %v449
    %vm757 = vcmp.eq.f32.partialorder %v756, 8.507059e+37
    %v758 = vand.u32 %v449, 2147483648
    %v759 = vor.u32 1.1754944e-38, %v758
    %v760 = vsel %vm757, %v759, %v755
    %v761 = vmul.f32 1.0, %v760
    %v762 = vrcp.pop %v450
    %v763 = vmul.f32 %v450, %v762
    %v764 = vsub.f32 1.0, %v763
    %v765 = vmul.f32 %v762, %v764
    %v766 = vadd.f32 %v762, %v765
    %vm767 = vweird.f32 %v450
    %vm768 = vweird.f32 %v762
    %vm769 = vmor %vm767, %vm768
    %v770 = vsel %vm769, %v762, %v766
    %v771 = vand.u32 2147483647, %v450
    %vm772 = vcmp.eq.f32.partialorder %v771, 8.507059e+37
    %v773 = vand.u32 %v450, 2147483648
    %v774 = vor.u32 1.1754944e-38, %v773
    %v775 = vsel %vm772, %v774, %v770
    %v776 = vmul.f32 1.0, %v775
    %v777 = vrcp.pop %v451
    %v778 = vmul.f32 %v451, %v777
    %v779 = vsub.f32 1.0, %v778
    %v780 = vmul.f32 %v777, %v779
    %v781 = vadd.f32 %v777, %v780
    %vm782 = vweird.f32 %v451
    %vm783 = vweird.f32 %v777
    %vm784 = vmor %vm782, %vm783
    %v785 = vsel %vm784, %v777, %v781
    %v786 = vand.u32 2147483647, %v451
    %vm787 = vcmp.eq.f32.partialorder %v786, 8.507059e+37
    %v788 = vand.u32 %v451, 2147483648
    %v789 = vor.u32 1.1754944e-38, %v788
    %v790 = vsel %vm787, %v789, %v785
    %v791 = vmul.f32 1.0, %v790
    %v792 = vrcp.pop %v452
    %v793 = vmul.f32 %v452, %v792
    %v794 = vsub.f32 1.0, %v793
    %v795 = vmul.f32 %v792, %v794
    %v796 = vadd.f32 %v792, %v795
    %vm797 = vweird.f32 %v452
    %vm798 = vweird.f32 %v792
    %vm799 = vmor %vm797, %vm798
    %v800 = vsel %vm799, %v792, %v796
    %v801 = vand.u32 2147483647, %v452
    %vm802 = vcmp.eq.f32.partialorder %v801, 8.507059e+37
    %v803 = vand.u32 %v452, 2147483648
    %v804 = vor.u32 1.1754944e-38, %v803
    %v805 = vsel %vm802, %v804, %v800
    %v806 = vmul.f32 1.0, %v805
    %v807 = vrcp.pop %v453
    %v808 = vmul.f32 %v453, %v807
    %v809 = vsub.f32 1.0, %v808
    %v810 = vmul.f32 %v807, %v809
    %v811 = vadd.f32 %v807, %v810
    %vm812 = vweird.f32 %v453
    %vm813 = vweird.f32 %v807
    %vm814 = vmor %vm812, %vm813
    %v815 = vsel %vm814, %v807, %v811
    %v816 = vand.u32 2147483647, %v453
    %vm817 = vcmp.eq.f32.partialorder %v816, 8.507059e+37
    %v818 = vand.u32 %v453, 2147483648
    %v819 = vor.u32 1.1754944e-38, %v818
    %v820 = vsel %vm817, %v819, %v815
    %v821 = vmul.f32 1.0, %v820
    %v822 = vrcp.pop %v454
    %v823 = vmul.f32 %v454, %v822
    %v824 = vsub.f32 1.0, %v823
    %v825 = vmul.f32 %v822, %v824
    %v826 = vadd.f32 %v822, %v825
    %vm827 = vweird.f32 %v454
    %vm828 = vweird.f32 %v822
    %vm829 = vmor %vm827, %vm828
    %v830 = vsel %vm829, %v822, %v826
    %v831 = vand.u32 2147483647, %v454
    %vm832 = vcmp.eq.f32.partialorder %v831, 8.507059e+37
    %v833 = vand.u32 %v454, 2147483648
    %v834 = vor.u32 1.1754944e-38, %v833
    %v835 = vsel %vm832, %v834, %v830
    %v836 = vmul.f32 1.0, %v835
    %v837 = vrcp.pop %v455
    %v838 = vmul.f32 %v455, %v837
    %v839 = vsub.f32 1.0, %v838
    %v840 = vmul.f32 %v837, %v839
    %v841 = vadd.f32 %v837, %v840
    %vm842 = vweird.f32 %v455
    %vm843 = vweird.f32 %v837
    %vm844 = vmor %vm842, %vm843
    %v845 = vsel %vm844, %v837, %v841
    %v846 = vand.u32 2147483647, %v455
    %vm847 = vcmp.eq.f32.partialorder %v846, 8.507059e+37
    %v848 = vand.u32 %v455, 2147483648
    %v849 = vor.u32 1.1754944e-38, %v848
    %v850 = vsel %vm847, %v849, %v845
    %v851 = vmul.f32 1.0, %v850
    %v852 = vrcp.pop %v456
    %v853 = vmul.f32 %v456, %v852
    %v854 = vsub.f32 1.0, %v853
    %v855 = vmul.f32 %v852, %v854
    %v856 = vadd.f32 %v852, %v855
    %vm857 = vweird.f32 %v456
    %vm858 = vweird.f32 %v852
    %vm859 = vmor %vm857, %vm858
    %v860 = vsel %vm859, %v852, %v856
    %v861 = vand.u32 2147483647, %v456
    %vm862 = vcmp.eq.f32.partialorder %v861, 8.507059e+37
    %v863 = vand.u32 %v456, 2147483648
    %v864 = vor.u32 1.1754944e-38, %v863
    %v865 = vsel %vm862, %v864, %v860
    %v866 = vmul.f32 1.0, %v865
    %v867 = vrcp.pop %v457
    %v868 = vmul.f32 %v457, %v867
    %v869 = vsub.f32 1.0, %v868
    %v870 = vmul.f32 %v867, %v869
    %v871 = vadd.f32 %v867, %v870
    %vm872 = vweird.f32 %v457
    %vm873 = vweird.f32 %v867
    %vm874 = vmor %vm872, %vm873
    %v875 = vsel %vm874, %v867, %v871
    %v876 = vand.u32 2147483647, %v457
    %vm877 = vcmp.eq.f32.partialorder %v876, 8.507059e+37
    %v878 = vand.u32 %v457, 2147483648
    %v879 = vor.u32 1.1754944e-38, %v878
    %v880 = vsel %vm877, %v879, %v875
    %v881 = vmul.f32 1.0, %v880
    %v882 = vrcp.pop %v458
    %v883 = vmul.f32 %v458, %v882
    %v884 = vsub.f32 1.0, %v883
    %v885 = vmul.f32 %v882, %v884
    %v886 = vadd.f32 %v882, %v885
    %vm887 = vweird.f32 %v458
    %vm888 = vweird.f32 %v882
    %vm889 = vmor %vm887, %vm888
    %v890 = vsel %vm889, %v882, %v886
    %v891 = vand.u32 2147483647, %v458
    %vm892 = vcmp.eq.f32.partialorder %v891, 8.507059e+37
    %v893 = vand.u32 %v458, 2147483648
    %v894 = vor.u32 1.1754944e-38, %v893
    %v895 = vsel %vm892, %v894, %v890
    %v896 = vmul.f32 1.0, %v895
    %v897 = vrcp.pop %v459
    %v898 = vmul.f32 %v459, %v897
    %v899 = vsub.f32 1.0, %v898
    %v900 = vmul.f32 %v897, %v899
    %v901 = vadd.f32 %v897, %v900
    %vm902 = vweird.f32 %v459
    %vm903 = vweird.f32 %v897
    %vm904 = vmor %vm902, %vm903
    %v905 = vsel %vm904, %v897, %v901
    %v906 = vand.u32 2147483647, %v459
    %vm907 = vcmp.eq.f32.partialorder %v906, 8.507059e+37
    %v908 = vand.u32 %v459, 2147483648
    %v909 = vor.u32 1.1754944e-38, %v908
    %v910 = vsel %vm907, %v909, %v905
    %v911 = vmul.f32 1.0, %v910
    %v912 = vrcp.pop %v460
    %v913 = vmul.f32 %v460, %v912
    %v914 = vsub.f32 1.0, %v913
    %v915 = vmul.f32 %v912, %v914
    %v916 = vadd.f32 %v912, %v915
    %vm917 = vweird.f32 %v460
    %vm918 = vweird.f32 %v912
    %vm919 = vmor %vm917, %vm918
    %v920 = vsel %vm919, %v912, %v916
    %v921 = vand.u32 2147483647, %v460
    %vm922 = vcmp.eq.f32.partialorder %v921, 8.507059e+37
    %v923 = vand.u32 %v460, 2147483648
    %v924 = vor.u32 1.1754944e-38, %v923
    %v925 = vsel %vm922, %v924, %v920
    %v926 = vmul.f32 1.0, %v925
    %v927 = vrcp.pop %v461
    %v928 = vmul.f32 %v461, %v927
    %v929 = vsub.f32 1.0, %v928
    %v930 = vmul.f32 %v927, %v929
    %v931 = vadd.f32 %v927, %v930
    %vm932 = vweird.f32 %v461
    %vm933 = vweird.f32 %v927
    %vm934 = vmor %vm932, %vm933
    %v935 = vsel %vm934, %v927, %v931
    %v936 = vand.u32 2147483647, %v461
    %vm937 = vcmp.eq.f32.partialorder %v936, 8.507059e+37
    %v938 = vand.u32 %v461, 2147483648
    %v939 = vor.u32 1.1754944e-38, %v938
    %v940 = vsel %vm937, %v939, %v935
    %v941 = vmul.f32 1.0, %v940
    %v942 = vld [vmem:[%s4] sm:$0xff]
    %v943 = vld [vmem:[%s4 + $0x8] sm:$0xff]
    %v944 = vperm.slane %v942, 0
    %v945 = vlaneseq
    %v946 = vshrl.u32 %v945, 7
    %948 = vset.pattern.permute.xlu0 %v946
    %949 = vperm.xlu0 %948, %v944
    %v950 = vpop.permute.xlu0 %949
    %v951 = vlaneseq
    %v952 = vshrl.u32 %v951, 7
    %v953 = vadd.s32 %v952, 8
    %954 = vset.pattern.permute.xlu0 %v953
    %955 = vperm.xlu0 %954, %v944
    %v956 = vpop.permute.xlu0 %955
    %v957 = vperm.slane %v942, 1
    %v958 = vlaneseq
    %v959 = vshrl.u32 %v958, 7
    %961 = vset.pattern.permute.xlu0 %v959
    %962 = vperm.xlu0 %961, %v957
    %v963 = vpop.permute.xlu0 %962
    %v964 = vlaneseq
    %v965 = vshrl.u32 %v964, 7
    %v966 = vadd.s32 %v965, 8
    %967 = vset.pattern.permute.xlu0 %v966
    %968 = vperm.xlu0 %967, %v957
    %v969 = vpop.permute.xlu0 %968
    %v970 = vperm.slane %v942, 2
    %v971 = vlaneseq
    %v972 = vshrl.u32 %v971, 7
    %974 = vset.pattern.permute.xlu0 %v972
    %975 = vperm.xlu0 %974, %v970
    %v976 = vpop.permute.xlu0 %975
    %v977 = vlaneseq
    %v978 = vshrl.u32 %v977, 7
    %v979 = vadd.s32 %v978, 8
    %980 = vset.pattern.permute.xlu0 %v979
    %981 = vperm.xlu0 %980, %v970
    %v982 = vpop.permute.xlu0 %981
    %v983 = vperm.slane %v942, 3
    %v984 = vlaneseq
    %v985 = vshrl.u32 %v984, 7
    %987 = vset.pattern.permute.xlu0 %v985
    %988 = vperm.xlu0 %987, %v983
    %v989 = vpop.permute.xlu0 %988
    %v990 = vlaneseq
    %v991 = vshrl.u32 %v990, 7
    %v992 = vadd.s32 %v991, 8
    %993 = vset.pattern.permute.xlu0 %v992
    %994 = vperm.xlu0 %993, %v983
    %v995 = vpop.permute.xlu0 %994
    %v996 = vperm.slane %v942, 4
    %v997 = vlaneseq
    %v998 = vshrl.u32 %v997, 7
    %1000 = vset.pattern.permute.xlu0 %v998
    %1001 = vperm.xlu0 %1000, %v996
    %v1002 = vpop.permute.xlu0 %1001
    %v1003 = vlaneseq
    %v1004 = vshrl.u32 %v1003, 7
    %v1005 = vadd.s32 %v1004, 8
    %1006 = vset.pattern.permute.xlu0 %v1005
    %1007 = vperm.xlu0 %1006, %v996
    %v1008 = vpop.permute.xlu0 %1007
    %v1009 = vperm.slane %v942, 5
    %v1010 = vlaneseq
    %v1011 = vshrl.u32 %v1010, 7
    %1013 = vset.pattern.permute.xlu0 %v1011
    %1014 = vperm.xlu0 %1013, %v1009
    %v1015 = vpop.permute.xlu0 %1014
    %v1016 = vlaneseq
    %v1017 = vshrl.u32 %v1016, 7
    %v1018 = vadd.s32 %v1017, 8
    %1019 = vset.pattern.permute.xlu0 %v1018
    %1020 = vperm.xlu0 %1019, %v1009
    %v1021 = vpop.permute.xlu0 %1020
    %v1022 = vperm.slane %v942, 6
    %v1023 = vlaneseq
    %v1024 = vshrl.u32 %v1023, 7
    %1026 = vset.pattern.permute.xlu0 %v1024
    %1027 = vperm.xlu0 %1026, %v1022
    %v1028 = vpop.permute.xlu0 %1027
    %v1029 = vlaneseq
    %v1030 = vshrl.u32 %v1029, 7
    %v1031 = vadd.s32 %v1030, 8
    %1032 = vset.pattern.permute.xlu0 %v1031
    %1033 = vperm.xlu0 %1032, %v1022
    %v1034 = vpop.permute.xlu0 %1033
    %v1035 = vperm.slane %v942, 7
    %v1036 = vlaneseq
    %v1037 = vshrl.u32 %v1036, 7
    %1039 = vset.pattern.permute.xlu0 %v1037
    %1040 = vperm.xlu0 %1039, %v1035
    %v1041 = vpop.permute.xlu0 %1040
    %v1042 = vlaneseq
    %v1043 = vshrl.u32 %v1042, 7
    %v1044 = vadd.s32 %v1043, 8
    %1045 = vset.pattern.permute.xlu0 %v1044
    %1046 = vperm.xlu0 %1045, %v1035
    %v1047 = vpop.permute.xlu0 %1046
    %v1048 = vperm.slane %v943, 0
    %v1049 = vlaneseq
    %v1050 = vshrl.u32 %v1049, 7
    %1052 = vset.pattern.permute.xlu0 %v1050
    %1053 = vperm.xlu0 %1052, %v1048
    %v1054 = vpop.permute.xlu0 %1053
    %v1055 = vlaneseq
    %v1056 = vshrl.u32 %v1055, 7
    %v1057 = vadd.s32 %v1056, 8
    %1058 = vset.pattern.permute.xlu0 %v1057
    %1059 = vperm.xlu0 %1058, %v1048
    %v1060 = vpop.permute.xlu0 %1059
    %v1061 = vperm.slane %v943, 1
    %v1062 = vlaneseq
    %v1063 = vshrl.u32 %v1062, 7
    %1065 = vset.pattern.permute.xlu0 %v1063
    %1066 = vperm.xlu0 %1065, %v1061
    %v1067 = vpop.permute.xlu0 %1066
    %v1068 = vlaneseq
    %v1069 = vshrl.u32 %v1068, 7
    %v1070 = vadd.s32 %v1069, 8
    %1071 = vset.pattern.permute.xlu0 %v1070
    %1072 = vperm.xlu0 %1071, %v1061
    %v1073 = vpop.permute.xlu0 %1072
    %v1074 = vperm.slane %v943, 2
    %v1075 = vlaneseq
    %v1076 = vshrl.u32 %v1075, 7
    %1078 = vset.pattern.permute.xlu0 %v1076
    %1079 = vperm.xlu0 %1078, %v1074
    %v1080 = vpop.permute.xlu0 %1079
    %v1081 = vlaneseq
    %v1082 = vshrl.u32 %v1081, 7
    %v1083 = vadd.s32 %v1082, 8
    %1084 = vset.pattern.permute.xlu0 %v1083
    %1085 = vperm.xlu0 %1084, %v1074
    %v1086 = vpop.permute.xlu0 %1085
    %v1087 = vperm.slane %v943, 3
    %v1088 = vlaneseq
    %v1089 = vshrl.u32 %v1088, 7
    %1091 = vset.pattern.permute.xlu0 %v1089
    %1092 = vperm.xlu0 %1091, %v1087
    %v1093 = vpop.permute.xlu0 %1092
    %v1094 = vlaneseq
    %v1095 = vshrl.u32 %v1094, 7
    %v1096 = vadd.s32 %v1095, 8
    %1097 = vset.pattern.permute.xlu0 %v1096
    %1098 = vperm.xlu0 %1097, %v1087
    %v1099 = vpop.permute.xlu0 %1098
    %v1100 = vperm.slane %v943, 4
    %v1101 = vlaneseq
    %v1102 = vshrl.u32 %v1101, 7
    %1104 = vset.pattern.permute.xlu0 %v1102
    %1105 = vperm.xlu0 %1104, %v1100
    %v1106 = vpop.permute.xlu0 %1105
    %v1107 = vlaneseq
    %v1108 = vshrl.u32 %v1107, 7
    %v1109 = vadd.s32 %v1108, 8
    %1110 = vset.pattern.permute.xlu0 %v1109
    %1111 = vperm.xlu0 %1110, %v1100
    %v1112 = vpop.permute.xlu0 %1111
    %v1113 = vperm.slane %v943, 5
    %v1114 = vlaneseq
    %v1115 = vshrl.u32 %v1114, 7
    %1117 = vset.pattern.permute.xlu0 %v1115
    %1118 = vperm.xlu0 %1117, %v1113
    %v1119 = vpop.permute.xlu0 %1118
    %v1120 = vlaneseq
    %v1121 = vshrl.u32 %v1120, 7
    %v1122 = vadd.s32 %v1121, 8
    %1123 = vset.pattern.permute.xlu0 %v1122
    %1124 = vperm.xlu0 %1123, %v1113
    %v1125 = vpop.permute.xlu0 %1124
    %v1126 = vperm.slane %v943, 6
    %v1127 = vlaneseq
    %v1128 = vshrl.u32 %v1127, 7
    %1130 = vset.pattern.permute.xlu0 %v1128
    %1131 = vperm.xlu0 %1130, %v1126
    %v1132 = vpop.permute.xlu0 %1131
    %v1133 = vlaneseq
    %v1134 = vshrl.u32 %v1133, 7
    %v1135 = vadd.s32 %v1134, 8
    %1136 = vset.pattern.permute.xlu0 %v1135
    %1137 = vperm.xlu0 %1136, %v1126
    %v1138 = vpop.permute.xlu0 %1137
    %v1139 = vperm.slane %v943, 7
    %v1140 = vlaneseq
    %v1141 = vshrl.u32 %v1140, 7
    %1143 = vset.pattern.permute.xlu0 %v1141
    %1144 = vperm.xlu0 %1143, %v1139
    %v1145 = vpop.permute.xlu0 %1144
    %v1146 = vlaneseq
    %v1147 = vshrl.u32 %v1146, 7
    %v1148 = vadd.s32 %v1147, 8
    %1149 = vset.pattern.permute.xlu0 %v1148
    %1150 = vperm.xlu0 %1149, %v1139
    %v1151 = vpop.permute.xlu0 %1150
    %v1152 = vmul.f32 %v950, %v476
    %v1153 = vmul.f32 %v956, %v491
    %v1154 = vmul.f32 %v963, %v506
    %v1155 = vmul.f32 %v969, %v521
    %v1156 = vmul.f32 %v976, %v536
    %v1157 = vmul.f32 %v982, %v551
    %v1158 = vmul.f32 %v989, %v566
    %v1159 = vmul.f32 %v995, %v581
    %v1160 = vmul.f32 %v1002, %v596
    %v1161 = vmul.f32 %v1008, %v611
    %v1162 = vmul.f32 %v1015, %v626
    %v1163 = vmul.f32 %v1021, %v641
    %v1164 = vmul.f32 %v1028, %v656
    %v1165 = vmul.f32 %v1034, %v671
    %v1166 = vmul.f32 %v1041, %v686
    %v1167 = vmul.f32 %v1047, %v701
    %v1168 = vmul.f32 %v1054, %v716
    %v1169 = vmul.f32 %v1060, %v731
    %v1170 = vmul.f32 %v1067, %v746
    %v1171 = vmul.f32 %v1073, %v761
    %v1172 = vmul.f32 %v1080, %v776
    %v1173 = vmul.f32 %v1086, %v791
    %v1174 = vmul.f32 %v1093, %v806
    %v1175 = vmul.f32 %v1099, %v821
    %v1176 = vmul.f32 %v1106, %v836
    %v1177 = vmul.f32 %v1112, %v851
    %v1178 = vmul.f32 %v1119, %v866
    %v1179 = vmul.f32 %v1125, %v881
    %v1180 = vmul.f32 %v1132, %v896
    %v1181 = vmul.f32 %v1138, %v911
    %v1182 = vmul.f32 %v1145, %v926
    %v1183 = vmul.f32 %v1151, %v941
    %1184 = vrot.lane.b32.xlu0 %v243, 64
    %v1185 = vpop.permute.xlu0 %1184
    %1186 = vrot.lane.b32.xlu0 %v246, 64
    %v1187 = vpop.permute.xlu0 %1186
    %v1190 = vmul.f32 %v1152, %v1185
    %v1191 = vmul.f32 %v1153, %v1187
    %v1192 = vmul.f32 %v1154, %v1185
    %v1193 = vmul.f32 %v1155, %v1187
    %v1194 = vmul.f32 %v1156, %v1185
    %v1195 = vmul.f32 %v1157, %v1187
    %v1196 = vmul.f32 %v1158, %v1185
    %v1197 = vmul.f32 %v1159, %v1187
    %v1198 = vmul.f32 %v1160, %v1185
    %v1199 = vmul.f32 %v1161, %v1187
    %v1200 = vmul.f32 %v1162, %v1185
    %v1201 = vmul.f32 %v1163, %v1187
    %v1202 = vmul.f32 %v1164, %v1185
    %v1203 = vmul.f32 %v1165, %v1187
    %v1204 = vmul.f32 %v1166, %v1185
    %v1205 = vmul.f32 %v1167, %v1187
    %v1206 = vmul.f32 %v1168, %v1185
    %v1207 = vmul.f32 %v1169, %v1187
    %v1208 = vmul.f32 %v1170, %v1185
    %v1209 = vmul.f32 %v1171, %v1187
    %v1210 = vmul.f32 %v1172, %v1185
    %v1211 = vmul.f32 %v1173, %v1187
    %v1212 = vmul.f32 %v1174, %v1185
    %v1213 = vmul.f32 %v1175, %v1187
    %v1214 = vmul.f32 %v1176, %v1185
    %v1215 = vmul.f32 %v1177, %v1187
    %v1216 = vmul.f32 %v1178, %v1185
    %v1217 = vmul.f32 %v1179, %v1187
    %v1218 = vmul.f32 %v1180, %v1185
    %v1219 = vmul.f32 %v1181, %v1187
    %v1220 = vmul.f32 %v1182, %v1185
    %v1221 = vmul.f32 %v1183, %v1187
    %v1222 = vsel %vm111, %v1190, 0.0
    %v1223 = vsel %vm111, %v1191, 0.0
    %v1224 = vadd.f32 %v1222, %v1223
    %v1225 = vrot.slane %v1224, 4
    %v1226 = vadd.f32 %v1224, %v1225
    %v1227 = vrot.slane %v1226, 2
    %v1228 = vadd.f32 %v1226, %v1227
    %v1229 = vrot.slane %v1228, 1
    %v1230 = vadd.f32 %v1228, %v1229
    %v1231 = vsel %vm111, %v1192, 0.0
    %v1232 = vsel %vm111, %v1193, 0.0
    %v1233 = vadd.f32 %v1231, %v1232
    %v1234 = vrot.slane %v1233, 4
    %v1235 = vadd.f32 %v1233, %v1234
    %v1236 = vrot.slane %v1235, 2
    %v1237 = vadd.f32 %v1235, %v1236
    %v1238 = vrot.slane %v1237, 1
    %v1239 = vadd.f32 %v1237, %v1238
    %v1240 = vsel %vm111, %v1194, 0.0
    %v1241 = vsel %vm111, %v1195, 0.0
    %v1242 = vadd.f32 %v1240, %v1241
    %v1243 = vrot.slane %v1242, 4
    %v1244 = vadd.f32 %v1242, %v1243
    %v1245 = vrot.slane %v1244, 2
    %v1246 = vadd.f32 %v1244, %v1245
    %v1247 = vrot.slane %v1246, 1
    %v1248 = vadd.f32 %v1246, %v1247
    %v1249 = vsel %vm111, %v1196, 0.0
    %v1250 = vsel %vm111, %v1197, 0.0
    %v1251 = vadd.f32 %v1249, %v1250
    %v1252 = vrot.slane %v1251, 4
    %v1253 = vadd.f32 %v1251, %v1252
    %v1254 = vrot.slane %v1253, 2
    %v1255 = vadd.f32 %v1253, %v1254
    %v1256 = vrot.slane %v1255, 1
    %v1257 = vadd.f32 %v1255, %v1256
    %v1258 = vsel %vm111, %v1198, 0.0
    %v1259 = vsel %vm111, %v1199, 0.0
    %v1260 = vadd.f32 %v1258, %v1259
    %v1261 = vrot.slane %v1260, 4
    %v1262 = vadd.f32 %v1260, %v1261
    %v1263 = vrot.slane %v1262, 2
    %v1264 = vadd.f32 %v1262, %v1263
    %v1265 = vrot.slane %v1264, 1
    %v1266 = vadd.f32 %v1264, %v1265
    %v1267 = vsel %vm111, %v1200, 0.0
    %v1268 = vsel %vm111, %v1201, 0.0
    %v1269 = vadd.f32 %v1267, %v1268
    %v1270 = vrot.slane %v1269, 4
    %v1271 = vadd.f32 %v1269, %v1270
    %v1272 = vrot.slane %v1271, 2
    %v1273 = vadd.f32 %v1271, %v1272
    %v1274 = vrot.slane %v1273, 1
    %v1275 = vadd.f32 %v1273, %v1274
    %v1276 = vsel %vm111, %v1202, 0.0
    %v1277 = vsel %vm111, %v1203, 0.0
    %v1278 = vadd.f32 %v1276, %v1277
    %v1279 = vrot.slane %v1278, 4
    %v1280 = vadd.f32 %v1278, %v1279
    %v1281 = vrot.slane %v1280, 2
    %v1282 = vadd.f32 %v1280, %v1281
    %v1283 = vrot.slane %v1282, 1
    %v1284 = vadd.f32 %v1282, %v1283
    %v1285 = vsel %vm111, %v1204, 0.0
    %v1286 = vsel %vm111, %v1205, 0.0
    %v1287 = vadd.f32 %v1285, %v1286
    %v1288 = vrot.slane %v1287, 4
    %v1289 = vadd.f32 %v1287, %v1288
    %v1290 = vrot.slane %v1289, 2
    %v1291 = vadd.f32 %v1289, %v1290
    %v1292 = vrot.slane %v1291, 1
    %v1293 = vadd.f32 %v1291, %v1292
    %v1294 = vsel %vm111, %v1206, 0.0
    %v1295 = vsel %vm111, %v1207, 0.0
    %v1296 = vadd.f32 %v1294, %v1295
    %v1297 = vrot.slane %v1296, 4
    %v1298 = vadd.f32 %v1296, %v1297
    %v1299 = vrot.slane %v1298, 2
    %v1300 = vadd.f32 %v1298, %v1299
    %v1301 = vrot.slane %v1300, 1
    %v1302 = vadd.f32 %v1300, %v1301
    %v1303 = vsel %vm111, %v1208, 0.0
    %v1304 = vsel %vm111, %v1209, 0.0
    %v1305 = vadd.f32 %v1303, %v1304
    %v1306 = vrot.slane %v1305, 4
    %v1307 = vadd.f32 %v1305, %v1306
    %v1308 = vrot.slane %v1307, 2
    %v1309 = vadd.f32 %v1307, %v1308
    %v1310 = vrot.slane %v1309, 1
    %v1311 = vadd.f32 %v1309, %v1310
    %v1312 = vsel %vm111, %v1210, 0.0
    %v1313 = vsel %vm111, %v1211, 0.0
    %v1314 = vadd.f32 %v1312, %v1313
    %v1315 = vrot.slane %v1314, 4
    %v1316 = vadd.f32 %v1314, %v1315
    %v1317 = vrot.slane %v1316, 2
    %v1318 = vadd.f32 %v1316, %v1317
    %v1319 = vrot.slane %v1318, 1
    %v1320 = vadd.f32 %v1318, %v1319
    %v1321 = vsel %vm111, %v1212, 0.0
    %v1322 = vsel %vm111, %v1213, 0.0
    %v1323 = vadd.f32 %v1321, %v1322
    %v1324 = vrot.slane %v1323, 4
    %v1325 = vadd.f32 %v1323, %v1324
    %v1326 = vrot.slane %v1325, 2
    %v1327 = vadd.f32 %v1325, %v1326
    %v1328 = vrot.slane %v1327, 1
    %v1329 = vadd.f32 %v1327, %v1328
    %v1330 = vsel %vm111, %v1214, 0.0
    %v1331 = vsel %vm111, %v1215, 0.0
    %v1332 = vadd.f32 %v1330, %v1331
    %v1333 = vrot.slane %v1332, 4
    %v1334 = vadd.f32 %v1332, %v1333
    %v1335 = vrot.slane %v1334, 2
    %v1336 = vadd.f32 %v1334, %v1335
    %v1337 = vrot.slane %v1336, 1
    %v1338 = vadd.f32 %v1336, %v1337
    %v1339 = vsel %vm111, %v1216, 0.0
    %v1340 = vsel %vm111, %v1217, 0.0
    %v1341 = vadd.f32 %v1339, %v1340
    %v1342 = vrot.slane %v1341, 4
    %v1343 = vadd.f32 %v1341, %v1342
    %v1344 = vrot.slane %v1343, 2
    %v1345 = vadd.f32 %v1343, %v1344
    %v1346 = vrot.slane %v1345, 1
    %v1347 = vadd.f32 %v1345, %v1346
    %v1348 = vsel %vm111, %v1218, 0.0
    %v1349 = vsel %vm111, %v1219, 0.0
    %v1350 = vadd.f32 %v1348, %v1349
    %v1351 = vrot.slane %v1350, 4
    %v1352 = vadd.f32 %v1350, %v1351
    %v1353 = vrot.slane %v1352, 2
    %v1354 = vadd.f32 %v1352, %v1353
    %v1355 = vrot.slane %v1354, 1
    %v1356 = vadd.f32 %v1354, %v1355
    %v1357 = vsel %vm111, %v1220, 0.0
    %v1358 = vsel %vm111, %v1221, 0.0
    %v1359 = vadd.f32 %v1357, %v1358
    %v1360 = vrot.slane %v1359, 4
    %v1361 = vadd.f32 %v1359, %v1360
    %v1362 = vrot.slane %v1361, 2
    %v1363 = vadd.f32 %v1361, %v1362
    %v1364 = vrot.slane %v1363, 1
    %v1365 = vadd.f32 %v1363, %v1364
    %1366 = vrot.lane.b32.xlu0 %v243, 32
    %v1367 = vpop.permute.xlu0 %1366
    %1368 = vrot.lane.b32.xlu0 %v250, 32
    %v1369 = vpop.permute.xlu0 %1368
    %1370 = vrot.lane.b32.xlu0 %v251, 32
    %v1371 = vpop.permute.xlu0 %1370
    %1372 = vrot.lane.b32.xlu0 %v252, 32
    %v1373 = vpop.permute.xlu0 %1372
    %1374 = vrot.lane.b32.xlu0 %v253, 32
    %v1375 = vpop.permute.xlu0 %1374
    %1376 = vrot.lane.b32.xlu0 %v254, 32
    %v1377 = vpop.permute.xlu0 %1376
    %1378 = vrot.lane.b32.xlu0 %v255, 32
    %v1379 = vpop.permute.xlu0 %1378
    %1380 = vrot.lane.b32.xlu0 %v256, 32
    %v1381 = vpop.permute.xlu0 %1380
    %1382 = vrot.lane.b32.xlu0 %v246, 32
    %v1383 = vpop.permute.xlu0 %1382
    %1384 = vrot.lane.b32.xlu0 %v257, 32
    %v1385 = vpop.permute.xlu0 %1384
    %1386 = vrot.lane.b32.xlu0 %v258, 32
    %v1387 = vpop.permute.xlu0 %1386
    %1388 = vrot.lane.b32.xlu0 %v259, 32
    %v1389 = vpop.permute.xlu0 %1388
    %1390 = vrot.lane.b32.xlu0 %v260, 32
    %v1391 = vpop.permute.xlu0 %1390
    %1392 = vrot.lane.b32.xlu0 %v261, 32
    %v1393 = vpop.permute.xlu0 %1392
    %1394 = vrot.lane.b32.xlu0 %v262, 32
    %v1395 = vpop.permute.xlu0 %1394
    %1396 = vrot.lane.b32.xlu0 %v263, 32
    %v1397 = vpop.permute.xlu0 %1396
    %v1414 = vadd.f32 %v1230, %v1367
    %v1415 = vadd.f32 %v1239, %v1369
    %v1416 = vadd.f32 %v1248, %v1371
    %v1417 = vadd.f32 %v1257, %v1373
    %v1418 = vadd.f32 %v1266, %v1375
    %v1419 = vadd.f32 %v1275, %v1377
    %v1420 = vadd.f32 %v1284, %v1379
    %v1421 = vadd.f32 %v1293, %v1381
    %v1422 = vadd.f32 %v1302, %v1383
    %v1423 = vadd.f32 %v1311, %v1385
    %v1424 = vadd.f32 %v1320, %v1387
    %v1425 = vadd.f32 %v1329, %v1389
    %v1426 = vadd.f32 %v1338, %v1391
    %v1427 = vadd.f32 %v1347, %v1393
    %v1428 = vadd.f32 %v1356, %v1395
    %v1429 = vadd.f32 %v1365, %v1397
    %v1430 = vld [vmem:[%s6] sm:$0x1]
    %v1432 = vperm.slane %v1430, 0
    %v1434 = vadd.f32 %v1414, %v1432
    %v1435 = vadd.f32 %v1415, %v1432
    %v1436 = vadd.f32 %v1416, %v1432
    %v1437 = vadd.f32 %v1417, %v1432
    %v1438 = vadd.f32 %v1418, %v1432
    %v1439 = vadd.f32 %v1419, %v1432
    %v1440 = vadd.f32 %v1420, %v1432
    %v1441 = vadd.f32 %v1421, %v1432
    %v1442 = vadd.f32 %v1422, %v1432
    %v1443 = vadd.f32 %v1423, %v1432
    %v1444 = vadd.f32 %v1424, %v1432
    %v1445 = vadd.f32 %v1425, %v1432
    %v1446 = vadd.f32 %v1426, %v1432
    %v1447 = vadd.f32 %v1427, %v1432
    %v1448 = vadd.f32 %v1428, %v1432
    %v1449 = vadd.f32 %v1429, %v1432
    %v1466 = vrot.slane %v1435, 7
    %vm1467 = vcmask 1041409
    %v1468 = vsel %vm1467, %v1466, %v1434
    %v1469 = vrot.slane %v1436, 6
    %vm1470 = vcmask 1042434
    %v1471 = vsel %vm1470, %v1469, %v1468
    %v1472 = vrot.slane %v1437, 5
    %vm1473 = vcmask 1043459
    %v1474 = vsel %vm1473, %v1472, %v1471
    %v1475 = vrot.slane %v1438, 4
    %vm1476 = vcmask 1044484
    %v1477 = vsel %vm1476, %v1475, %v1474
    %v1478 = vrot.slane %v1439, 3
    %vm1479 = vcmask 1045509
    %v1480 = vsel %vm1479, %v1478, %v1477
    %v1481 = vrot.slane %v1440, 2
    %vm1482 = vcmask 1046534
    %v1483 = vsel %vm1482, %v1481, %v1480
    %v1484 = vrot.slane %v1441, 1
    %vm1485 = vcmask 1047559
    %v1486 = vsel %vm1485, %v1484, %v1483
    %v1487 = vrot.slane %v1443, 7
    %v1488 = vsel %vm1467, %v1487, %v1442
    %v1489 = vrot.slane %v1444, 6
    %v1490 = vsel %vm1470, %v1489, %v1488
    %v1491 = vrot.slane %v1445, 5
    %v1492 = vsel %vm1473, %v1491, %v1490
    %v1493 = vrot.slane %v1446, 4
    %v1494 = vsel %vm1476, %v1493, %v1492
    %v1495 = vrot.slane %v1447, 3
    %v1496 = vsel %vm1479, %v1495, %v1494
    %v1497 = vrot.slane %v1448, 2
    %v1498 = vsel %vm1482, %v1497, %v1496
    %v1499 = vrot.slane %v1449, 1
    %v1500 = vsel %vm1485, %v1499, %v1498
    %1503 = vst.msk [vmem:[#allocation3] sm:$0xff] %vm111, %v1486
    %1504 = vst.msk [vmem:[#allocation3 + $0x8] sm:$0xff] %vm111, %v1500
    // Predicated region
    $region30: #{res_gate_graph_forward.1} parent=1 // pred_check
      _
    $region31: #{res_gate_graph_forward.1} parent=1 // pred_check_branch
      %1506 = sbr.rel (0) target = $region33
    $region32: #{res_gate_graph_forward.1} parent=1 // pred_region
      %1508 = vsyncadd [#allocation4], 0
      %s1509 = sshll.u32 [#allocation3], 4
      %s1510 = int_to_ptr.vmem [resolvable:$true] %s1509
      %s1511 = sshll.u32 %s7, 4
      %s1512 = int_to_ptr.hbm [resolvable:$true] %s1511
      %1517 = dma.vmem_to_hbm [thread:$0]  %s1510, 256, %s1512, [#allocation4], 128, 128, 8
    $region33: #{res_gate_graph_forward.1} parent=1 // pred_fallthru
      _
    // Predicated region
    $region34: #{res_gate_graph_forward.1} parent=1 // pred_check
      _
    $region35: #{res_gate_graph_forward.1} parent=1 // pred_check_branch
      %1519 = sbr.rel (0) target = $region37
    $region36: #{res_gate_graph_forward.1} parent=1 // pred_region
      %1521 = dma.done [#allocation4], 256
    $region37: #{res_gate_graph_forward.1} parent=1 // pred_fallthru
      _
    %1522 = vsyncpa [#allocation4], 1

</llo_original>
